<compile_context>
chip_gen: v7x
topology: tpu7x:2x2x1
jax: 0.10.0
libtpu: 0.0.40
codegen_flags: <defaults>
</compile_context>

<pallas_src>
import jax
import jax.numpy as jnp
from jax.experimental import pallas as pl
from jax.experimental.pallas import tpu as pltpu

LANE = 128  # TPU lane width


def _round_up(n, m):
    return ((n + m - 1) // m) * m


def mlp_kernel(x_ref, w1_ref, b1_ref, w2_ref, b2_ref, w3_ref, b3_ref, o_ref):
    # x_ref: bf16 [TILE_B, D_in]; weights bf16 [in, out]; biases f32 [1, out]
    x = x_ref[...]

    # Layer 1: Linear (bf16 MXU, f32 accumulate) + bias + ReLU in f32 (VPU)
    h1 = jnp.dot(x, w1_ref[...], preferred_element_type=jnp.float32)
    h1 = jnp.maximum(h1 + b1_ref[...], 0.0)
    # Dropout(p=0.3) is identity at inference.

    # Layer 2
    h2 = jnp.dot(h1.astype(jnp.bfloat16), w2_ref[...],
                 preferred_element_type=jnp.float32)
    h2 = jnp.maximum(h2 + b2_ref[...], 0.0)

    # Layer 3 (output head; lane-dense because W3 is padded to 128 columns)
    y = jnp.dot(h2.astype(jnp.bfloat16), w3_ref[...],
                preferred_element_type=jnp.float32)
    o_ref[...] = (y + b3_ref[...]).astype(o_ref.dtype)


def mlp_forward(x, w1, b1, w2, b2, w3, b3, *, tile_b=None):
    B, d_in = x.shape
    out_dims = w3.shape[1]

    # Batch tile: multiple of 256 (MXU alignment), large enough to amortize the
    # ~0.35 us/step grid overhead, small enough for v7x's 64 MiB VMEM budget.
    if tile_b is None:
        tile_b = min(512, _round_up(B, 256))
    b_pad = _round_up(B, tile_b)
    out_pad = _round_up(out_dims, LANE)

    # bf16 matmul inputs (f32 accumulation happens inside the kernel).
    xb = x.astype(jnp.bfloat16)
    if b_pad != B:
        xb = jnp.pad(xb, ((0, b_pad - B), (0, 0)))

    # Lane-dense output head: zero-pad W3/b3 to a multiple of 128 columns.
    if out_pad != out_dims:
        w3 = jnp.pad(w3, ((0, 0), (0, out_pad - out_dims)))
        b3 = jnp.pad(b3, ((0, out_pad - out_dims),))

    w1b = w1.astype(jnp.bfloat16)
    w2b = w2.astype(jnp.bfloat16)
    w3b = w3.astype(jnp.bfloat16)
    b1_2d = b1.reshape(1, -1).astype(jnp.float32)
    b2_2d = b2.reshape(1, -1).astype(jnp.float32)
    b3_2d = b3.reshape(1, -1).astype(jnp.float32)

    grid = (b_pad // tile_b,)
    # Weights/biases: same block every grid step -> stay VMEM-resident.
    resident = lambda shape: pl.BlockSpec(shape, lambda i: (0, 0))

    out = pl.pallas_call(
        mlp_kernel,
        out_shape=jax.ShapeDtypeStruct((b_pad, out_pad), jnp.float32),
        grid=grid,
        in_specs=[
            pl.BlockSpec((tile_b, d_in), lambda i: (i, 0)),   # X batch tile
            resident(w1b.shape),
            resident(b1_2d.shape),
            resident(w2b.shape),
            resident(b2_2d.shape),
            resident(w3b.shape),
            resident(b3_2d.shape),
        ],
        out_specs=pl.BlockSpec((tile_b, out_pad), lambda i: (i, 0)),
        compiler_params=pltpu.CompilerParams(
            dimension_semantics=("parallel",)),  # shard batch over v7x's 2 TCs
    )(xb, w1b, b1_2d, w2b, b2_2d, w3b, b3_2d)

    return out[:B, :out_dims]


def init_params(key, input_dims=256, hidden_dims=(256, 256), output_dims=1):
    """Deterministic init mimicking nn.Linear's uniform(-1/sqrt(fan_in), 1/sqrt(fan_in))."""
    dims = [input_dims, hidden_dims[0], hidden_dims[1], output_dims]
    params = []
    for i in range(3):
        fan_in, fan_out = dims[i], dims[i + 1]
        key, kw, kb = jax.random.split(key, 3)
        bound = 1.0 / jnp.sqrt(float(fan_in))
        # stored as [in, out] (transposed vs. PyTorch's [out, in]) for x @ W
        W = jax.random.uniform(kw, (fan_in, fan_out), jnp.float32, -bound, bound)
        b = jax.random.uniform(kb, (fan_out,), jnp.float32, -bound, bound)
        params += [W, b]
    return params


def reference_bf16(x, w1, b1, w2, b2, w3, b3):
    """Plain-JAX reference using the same bf16-in / f32-accumulate recipe."""
    h1 = jnp.dot(x.astype(jnp.bfloat16), w1.astype(jnp.bfloat16),
                 preferred_element_type=jnp.float32) + b1
    h1 = jnp.maximum(h1, 0.0)
    h2 = jnp.dot(h1.astype(jnp.bfloat16), w2.astype(jnp.bfloat16),
                 preferred_element_type=jnp.float32) + b2
    h2 = jnp.maximum(h2, 0.0)
    return jnp.dot(h2.astype(jnp.bfloat16), w3.astype(jnp.bfloat16),
                   preferred_element_type=jnp.float32) + b3


def reference_f32(x, w1, b1, w2, b2, w3, b3):
    h1 = jnp.maximum(x @ w1 + b1, 0.0)
    h2 = jnp.maximum(h1 @ w2 + b2, 0.0)
    return h2 @ w3 + b3


if __name__ == "__main__":
    key = jax.random.PRNGKey(0)
    key, kx1, kx2 = jax.random.split(key, 3)

    input_dims = 256
    w1, b1, w2, b2, w3, b3 = init_params(key, input_dims, (256, 256), 1)

    # Case 1: batch exercising the grid (two batch tiles of 512).
    x_big = jax.random.normal(kx1, (1024, input_dims), jnp.float32)
    out_big = mlp_forward(x_big, w1, b1, w2, b2, w3, b3)
    jax.block_until_ready(out_big)
    assert out_big.shape == (1024, 1)
    ref_b = reference_bf16(x_big, w1, b1, w2, b2, w3, b3)
    ref_f = reference_f32(x_big, w1, b1, w2, b2, w3, b3)
    assert jnp.allclose(out_big, ref_b, atol=1e-3, rtol=1e-2)
    assert jnp.allclose(out_big, ref_f, atol=5e-2, rtol=5e-2)

    # Case 2: small batch (exercises batch padding to the tile size).
    x_small = jax.random.normal(kx2, (8, input_dims), jnp.float32)
    out_small = mlp_forward(x_small, w1, b1, w2, b2, w3, b3)
    jax.block_until_ready(out_small)
    assert out_small.shape == (8, 1)
    ref_bs = reference_bf16(x_small, w1, b1, w2, b2, w3, b3)
    ref_fs = reference_f32(x_small, w1, b1, w2, b2, w3, b3)
    assert jnp.allclose(out_small, ref_bs, atol=1e-3, rtol=1e-2)
    assert jnp.allclose(out_small, ref_fs, atol=5e-2, rtol=5e-2)

    print("KERNEL_OK")
</pallas_src>

<mosaic_0001>
module attributes {stable_mosaic.version = 11 : i64} {
  func.func @mlp_kernel(%arg0: i32, %arg1: memref<512x256xbf16, #tpu.memory_space<vmem>>, %arg2: memref<256x256xbf16, #tpu.memory_space<vmem>>, %arg3: memref<1x256xf32, #tpu.memory_space<vmem>>, %arg4: memref<256x256xbf16, #tpu.memory_space<vmem>>, %arg5: memref<1x256xf32, #tpu.memory_space<vmem>>, %arg6: memref<256x128xbf16, #tpu.memory_space<vmem>>, %arg7: memref<1x128xf32, #tpu.memory_space<vmem>>, %arg8: memref<512x128xf32, #tpu.memory_space<vmem>>) attributes {dimension_semantics = [#tpu.dimension_semantics<parallel>], iteration_bounds = array<i64: 2>, scalar_prefetch = 0 : i64, scratch_operands = 0 : i64, tpu.core_type = #tpu.core_type<tc>, window_params = [{transform_indices = @transform_0, window_bounds = array<i64: 512, 256>}, {pipeline_mode = #tpu.pipeline_mode<synchronous>, transform_indices = @transform_1, window_bounds = array<i64: 256, 256>}, {pipeline_mode = #tpu.pipeline_mode<synchronous>, transform_indices = @transform_2, window_bounds = array<i64: 1, 256>}, {pipeline_mode = #tpu.pipeline_mode<synchronous>, transform_indices = @transform_3, window_bounds = array<i64: 256, 256>}, {pipeline_mode = #tpu.pipeline_mode<synchronous>, transform_indices = @transform_4, window_bounds = array<i64: 1, 256>}, {pipeline_mode = #tpu.pipeline_mode<synchronous>, transform_indices = @transform_5, window_bounds = array<i64: 256, 128>}, {pipeline_mode = #tpu.pipeline_mode<synchronous>, transform_indices = @transform_6, window_bounds = array<i64: 1, 128>}, {transform_indices = @transform_7, window_bounds = array<i64: 512, 128>}]} {
    %c0 = arith.constant 0 : index
    %c0_0 = arith.constant 0 : index
    %0 = vector.load %arg1[%c0, %c0_0] : memref<512x256xbf16, #tpu.memory_space<vmem>>, vector<512x256xbf16>
    %c0_1 = arith.constant 0 : index
    %c0_2 = arith.constant 0 : index
    %1 = vector.load %arg2[%c0_1, %c0_2] : memref<256x256xbf16, #tpu.memory_space<vmem>>, vector<256x256xbf16>
    %cst = arith.constant dense<0.000000e+00> : vector<512x256xf32>
    %2 = tpu.matmul %0, %1, %cst {dimension_numbers = #tpu.dot_dimension_numbers<[1], [0], [0], [1], [0, 0, 1, 1], [], []>} : vector<512x256xbf16>, vector<256x256xbf16>, vector<512x256xf32> -> vector<512x256xf32>
    %c0_3 = arith.constant 0 : index
    %c0_4 = arith.constant 0 : index
    %3 = vector.load %arg3[%c0_3, %c0_4] : memref<1x256xf32, #tpu.memory_space<vmem>>, vector<1x256xf32>
    %4 = vector.broadcast %3 : vector<1x256xf32> to vector<512x256xf32>
    %5 = arith.addf %2, %4 : vector<512x256xf32>
    %cst_5 = arith.constant 0.000000e+00 : f32
    %6 = vector.broadcast %cst_5 : f32 to vector<512x256xf32>
    %7 = arith.maximumf %5, %6 : vector<512x256xf32>
    %8 = arith.truncf %7 : vector<512x256xf32> to vector<512x256xbf16>
    %c0_6 = arith.constant 0 : index
    %c0_7 = arith.constant 0 : index
    %9 = vector.load %arg4[%c0_6, %c0_7] : memref<256x256xbf16, #tpu.memory_space<vmem>>, vector<256x256xbf16>
    %cst_8 = arith.constant dense<0.000000e+00> : vector<512x256xf32>
    %10 = tpu.matmul %8, %9, %cst_8 {dimension_numbers = #tpu.dot_dimension_numbers<[1], [0], [0], [1], [0, 0, 1, 1], [], []>} : vector<512x256xbf16>, vector<256x256xbf16>, vector<512x256xf32> -> vector<512x256xf32>
    %c0_9 = arith.constant 0 : index
    %c0_10 = arith.constant 0 : index
    %11 = vector.load %arg5[%c0_9, %c0_10] : memref<1x256xf32, #tpu.memory_space<vmem>>, vector<1x256xf32>
    %12 = vector.broadcast %11 : vector<1x256xf32> to vector<512x256xf32>
    %13 = arith.addf %10, %12 : vector<512x256xf32>
    %cst_11 = arith.constant 0.000000e+00 : f32
    %14 = vector.broadcast %cst_11 : f32 to vector<512x256xf32>
    %15 = arith.maximumf %13, %14 : vector<512x256xf32>
    %16 = arith.truncf %15 : vector<512x256xf32> to vector<512x256xbf16>
    %c0_12 = arith.constant 0 : index
    %c0_13 = arith.constant 0 : index
    %17 = vector.load %arg6[%c0_12, %c0_13] : memref<256x128xbf16, #tpu.memory_space<vmem>>, vector<256x128xbf16>
    %cst_14 = arith.constant dense<0.000000e+00> : vector<512x128xf32>
    %18 = tpu.matmul %16, %17, %cst_14 {dimension_numbers = #tpu.dot_dimension_numbers<[1], [0], [0], [1], [0, 0, 1, 1], [], []>} : vector<512x256xbf16>, vector<256x128xbf16>, vector<512x128xf32> -> vector<512x128xf32>
    %c0_15 = arith.constant 0 : index
    %c0_16 = arith.constant 0 : index
    %19 = vector.load %arg7[%c0_15, %c0_16] : memref<1x128xf32, #tpu.memory_space<vmem>>, vector<1x128xf32>
    %20 = vector.broadcast %19 : vector<1x128xf32> to vector<512x128xf32>
    %21 = arith.addf %18, %20 : vector<512x128xf32>
    %c0_17 = arith.constant 0 : index
    %c0_18 = arith.constant 0 : index
    %22 = vector.load %arg8[%c0_17, %c0_18] : memref<512x128xf32, #tpu.memory_space<vmem>>, vector<512x128xf32>
    tpu.vector_store %arg8[%c0_17, %c0_18], %21 {strides = array<i32>} : memref<512x128xf32, #tpu.memory_space<vmem>>, vector<512x128xf32>,
    return
  }
  func.func @transform_0(%arg0: i32) -> (i32, i32) {
    %c0_i32 = arith.constant 0 : i32
    %c0_i32_0 = arith.constant 0 : i32
    return %arg0, %c0_i32 : i32, i32
  }
  func.func @transform_1(%arg0: i32) -> (i32, i32) {
    %c0_i32 = arith.constant 0 : i32
    %c0_i32_0 = arith.constant 0 : i32
    %c0_i32_1 = arith.constant 0 : i32
    return %c0_i32, %c0_i32_0 : i32, i32
  }
  func.func @transform_2(%arg0: i32) -> (i32, i32) {
    %c0_i32 = arith.constant 0 : i32
    %c0_i32_0 = arith.constant 0 : i32
    %c0_i32_1 = arith.constant 0 : i32
    return %c0_i32, %c0_i32_0 : i32, i32
  }
  func.func @transform_3(%arg0: i32) -> (i32, i32) {
    %c0_i32 = arith.constant 0 : i32
    %c0_i32_0 = arith.constant 0 : i32
    %c0_i32_1 = arith.constant 0 : i32
    return %c0_i32, %c0_i32_0 : i32, i32
  }
  func.func @transform_4(%arg0: i32) -> (i32, i32) {
    %c0_i32 = arith.constant 0 : i32
    %c0_i32_0 = arith.constant 0 : i32
    %c0_i32_1 = arith.constant 0 : i32
    return %c0_i32, %c0_i32_0 : i32, i32
  }
  func.func @transform_5(%arg0: i32) -> (i32, i32) {
    %c0_i32 = arith.constant 0 : i32
    %c0_i32_0 = arith.constant 0 : i32
    %c0_i32_1 = arith.constant 0 : i32
    return %c0_i32, %c0_i32_0 : i32, i32
  }
  func.func @transform_6(%arg0: i32) -> (i32, i32) {
    %c0_i32 = arith.constant 0 : i32
    %c0_i32_0 = arith.constant 0 : i32
    %c0_i32_1 = arith.constant 0 : i32
    return %c0_i32, %c0_i32_0 : i32, i32
  }
  func.func @transform_7(%arg0: i32) -> (i32, i32) {
    %c0_i32 = arith.constant 0 : i32
    %c0_i32_0 = arith.constant 0 : i32
    return %arg0, %c0_i32 : i32, i32
  }
}

</mosaic_0001>

<llo_original>
// kernel: tpu_custom_call.1
$region0: #{tpu_custom_call.1}
  #allocation0 [shape = 'u32[]', space=smem, size = 0x4, offset = 0x4, fixed_abs, tag = 'smem constant byte address 0x4 - core index']
  #allocation1 [shape = 'u32[144,128]{1,0:T(1,128)}', space=vmem, size = 0x12000, scoped, tag = 'internal scratch']
  %s0 = inlined_call_operand.hbm [shape: bf16[1024,256], index: 0, kind: input, shape index: {}]
  %s1 = inlined_call_operand.hbm [shape: bf16[256,256], index: 1, kind: input, shape index: {}]
  %s2 = inlined_call_operand.vmem [shape: f32[1,256], index: 2, kind: input, shape index: {}]
  %s3 = inlined_call_operand.hbm [shape: bf16[256,256], index: 3, kind: input, shape index: {}]
  %s4 = inlined_call_operand.vmem [shape: f32[1,256], index: 4, kind: input, shape index: {}]
  %s5 = inlined_call_operand.hbm [shape: bf16[256,128], index: 5, kind: input, shape index: {}]
  %s6 = inlined_call_operand.vmem [shape: f32[1,128], index: 6, kind: input, shape index: {}]
  %s7 = inlined_call_operand.hbm [shape: f32[1024,128], index: 7, kind: output, shape index: {}]
  %s8 = sld [smem:[#allocation0]]
  $region77: #{tpu_custom_call.1} parent=0
    _
  %s10 = ssub.s32 1, %s8
  %s11 = scalar_select 0, %s10, %s8
  $region1: #{tpu_custom_call.1} parent=0
    #allocation2 [shape = 'u8[524288]{0}', space=vmem, size = 0x80000, scoped, tag = 'input window, operand 0']
    #allocation3 [shape = 's32[2]{0}', space=sflag, size = 0x8, scoped, tag = 'scoped memory for tpu_custom_call.1']
    #allocation4 [shape = 's32[2]{0}', space=sflag, size = 0x8, scoped, tag = 'scoped memory for tpu_custom_call.1']
    #allocation5 [shape = 'u8[131072]{0}', space=vmem, size = 0x20000, scoped, tag = 'input window, operand 1, single buffered']
    #allocation6 [shape = 's32[1]{0}', space=sflag, size = 0x4, scoped, tag = 'scoped memory for tpu_custom_call.1']
    #allocation7 [shape = 'u8[131072]{0}', space=vmem, size = 0x20000, scoped, tag = 'input window, operand 3, single buffered']
    #allocation8 [shape = 'u8[65536]{0}', space=vmem, size = 0x10000, scoped, tag = 'input window, operand 5, single buffered']
    #allocation9 [shape = 's32[1]{0}', space=sflag, size = 0x4, scoped, tag = 'scoped memory for tpu_custom_call.1']
    #allocation10 [shape = 'u8[524288]{0}', space=vmem, size = 0x80000, scoped, tag = 'output window, operand 0']
    %12 = vsyncpa [#allocation3], 0
    %s13 = scalar_lea.sflag [#allocation3], 1
    %14 = vsyncpa %s13, 0
    %15 = vsyncpa [#allocation6], 0
    %16 = vsyncpa [#allocation9], 0
    %17 = vsyncpa [#allocation4], 0
    %s18 = scalar_lea.sflag [#allocation4], 1
    %19 = vsyncpa %s18, 0
    loop: start=0, step=1, limit=4
    $region2: #{tpu_custom_call.1} parent=1 // loop_pre_header
      _
    $region3: #{tpu_custom_call.1} parent=1 // loop_header
      %s21 = sphi 0, %s25
      %p22 = scmp.ge.s32.totalorder %s21, 4
      %s31 = sphi 0, %s33
      %s34 = sphi 0, %s31
      %s35 = sphi 0, %s34
      %s51 = sphi 0, %s35
      %s55 = sphi 0, %s55
      %s57 = sphi 0, %s55
      %s58 = sphi 0, %s57
      %s72 = sphi 0, %s58
      %s76 = sphi 0, %s76
      %s78 = sphi 0, %s76
      %s79 = sphi 0, %s78
      %s93 = sphi 0, %s79
      %s97 = sphi 0, %s97
      %s99 = sphi 0, %s97
      %s100 = sphi 0, %s99
      %s114 = sphi 0, %s100
      %s118 = sphi 0, %s118
      %s120 = sphi 0, %s118
      %s121 = sphi 0, %s120
      %s135 = sphi 0, %s121
      %s139 = sphi 0, %s139
      %s141 = sphi 0, %s139
      %s142 = sphi 0, %s141
      %s156 = sphi 0, %s142
      %s160 = sphi 0, %s160
      %s162 = sphi 0, %s160
      %s163 = sphi 0, %s162
      %s177 = sphi 0, %s163
      %s183 = sphi 0, %s185
      %s186 = sphi 0, %s183
      %s187 = sphi 0, %s186
      %s203 = sphi 0, %s187
    $region4: #{tpu_custom_call.1} parent=1 // loop_header_branch
      %24 = sbr.rel (%p22) target = $region8
    $region5: #{tpu_custom_call.1} parent=1 // loop_body
      %s26 = ssub.s32 %s21, 1
      %s27 = ssub.s32 %s21, 2
      %s28 = sadd.s32 %s21, 1
      %s29 = ssub.s32 %s21, %s28
      %p30 = scmp.eq.s32.totalorder %s29, 0
      %s32 = sadd.s32 %s31, 1
      %s33 = scalar_select %p30, %s31, %s32
      %p36 = pneg %p30
      %p37 = scmp.eq.s32.totalorder %s21, 1
      %p38 = por %p36, %p37
      %p39 = scmp.ne.s32.totalorder %s31, %s34
      %p40 = scmp.eq.s32.totalorder %s21, 0
      %p41 = por %p39, %p40
      %p42 = scmp.ne.s32.totalorder %s31, %s34
      %p43 = scmp.eq.s32.totalorder %s26, 1
      %p44 = por %p42, %p43
      %p45 = scmp.ne.s32.totalorder %s34, %s35
      %p46 = scmp.eq.s32.totalorder %s26, 0
      %p47 = por %p45, %p46
      %p48 = scmp.ne.s32.totalorder %s34, %s35
      %p49 = scmp.eq.s32.totalorder %s27, 1
      %p50 = por %p48, %p49
      %p52 = scmp.ne.s32.totalorder %s35, %s51
      %p53 = scmp.eq.s32.totalorder %s27, 0
      %p54 = por %p52, %p53
      %s56 = sadd.s32 %s55, 1
      %p59 = scmp.eq.s32.totalorder %s21, 1
      %p60 = scmp.ne.s32.totalorder %s55, %s57
      %p61 = scmp.eq.s32.totalorder %s21, 0
      %p62 = por %p60, %p61
      %p63 = scmp.ne.s32.totalorder %s55, %s57
      %p64 = scmp.eq.s32.totalorder %s26, 1
      %p65 = por %p63, %p64
      %p66 = scmp.ne.s32.totalorder %s57, %s58
      %p67 = scmp.eq.s32.totalorder %s26, 0
      %p68 = por %p66, %p67
      %p69 = scmp.ne.s32.totalorder %s57, %s58
      %p70 = scmp.eq.s32.totalorder %s27, 1
      %p71 = por %p69, %p70
      %p73 = scmp.ne.s32.totalorder %s58, %s72
      %p74 = scmp.eq.s32.totalorder %s27, 0
      %p75 = por %p73, %p74
      %s77 = sadd.s32 %s76, 1
      %p80 = scmp.eq.s32.totalorder %s21, 1
      %p81 = scmp.ne.s32.totalorder %s76, %s78
      %p82 = scmp.eq.s32.totalorder %s21, 0
      %p83 = por %p81, %p82
      %p84 = scmp.ne.s32.totalorder %s76, %s78
      %p85 = scmp.eq.s32.totalorder %s26, 1
      %p86 = por %p84, %p85
      %p87 = scmp.ne.s32.totalorder %s78, %s79
      %p88 = scmp.eq.s32.totalorder %s26, 0
      %p89 = por %p87, %p88
      %p90 = scmp.ne.s32.totalorder %s78, %s79
      %p91 = scmp.eq.s32.totalorder %s27, 1
      %p92 = por %p90, %p91
      %p94 = scmp.ne.s32.totalorder %s79, %s93
      %p95 = scmp.eq.s32.totalorder %s27, 0
      %p96 = por %p94, %p95
      %s98 = sadd.s32 %s97, 1
      %p101 = scmp.eq.s32.totalorder %s21, 1
      %p102 = scmp.ne.s32.totalorder %s97, %s99
      %p103 = scmp.eq.s32.totalorder %s21, 0
      %p104 = por %p102, %p103
      %p105 = scmp.ne.s32.totalorder %s97, %s99
      %p106 = scmp.eq.s32.totalorder %s26, 1
      %p107 = por %p105, %p106
      %p108 = scmp.ne.s32.totalorder %s99, %s100
      %p109 = scmp.eq.s32.totalorder %s26, 0
      %p110 = por %p108, %p109
      %p111 = scmp.ne.s32.totalorder %s99, %s100
      %p112 = scmp.eq.s32.totalorder %s27, 1
      %p113 = por %p111, %p112
      %p115 = scmp.ne.s32.totalorder %s100, %s114
      %p116 = scmp.eq.s32.totalorder %s27, 0
      %p117 = por %p115, %p116
      %s119 = sadd.s32 %s118, 1
      %p122 = scmp.eq.s32.totalorder %s21, 1
      %p123 = scmp.ne.s32.totalorder %s118, %s120
      %p124 = scmp.eq.s32.totalorder %s21, 0
      %p125 = por %p123, %p124
      %p126 = scmp.ne.s32.totalorder %s118, %s120
      %p127 = scmp.eq.s32.totalorder %s26, 1
      %p128 = por %p126, %p127
      %p129 = scmp.ne.s32.totalorder %s120, %s121
      %p130 = scmp.eq.s32.totalorder %s26, 0
      %p131 = por %p129, %p130
      %p132 = scmp.ne.s32.totalorder %s120, %s121
      %p133 = scmp.eq.s32.totalorder %s27, 1
      %p134 = por %p132, %p133
      %p136 = scmp.ne.s32.totalorder %s121, %s135
      %p137 = scmp.eq.s32.totalorder %s27, 0
      %p138 = por %p136, %p137
      %s140 = sadd.s32 %s139, 1
      %p143 = scmp.eq.s32.totalorder %s21, 1
      %p144 = scmp.ne.s32.totalorder %s139, %s141
      %p145 = scmp.eq.s32.totalorder %s21, 0
      %p146 = por %p144, %p145
      %p147 = scmp.ne.s32.totalorder %s139, %s141
      %p148 = scmp.eq.s32.totalorder %s26, 1
      %p149 = por %p147, %p148
      %p150 = scmp.ne.s32.totalorder %s141, %s142
      %p151 = scmp.eq.s32.totalorder %s26, 0
      %p152 = por %p150, %p151
      %p153 = scmp.ne.s32.totalorder %s141, %s142
      %p154 = scmp.eq.s32.totalorder %s27, 1
      %p155 = por %p153, %p154
      %p157 = scmp.ne.s32.totalorder %s142, %s156
      %p158 = scmp.eq.s32.totalorder %s27, 0
      %p159 = por %p157, %p158
      %s161 = sadd.s32 %s160, 1
      %p164 = scmp.eq.s32.totalorder %s21, 1
      %p165 = scmp.ne.s32.totalorder %s160, %s162
      %p166 = scmp.eq.s32.totalorder %s21, 0
      %p167 = por %p165, %p166
      %p168 = scmp.ne.s32.totalorder %s160, %s162
      %p169 = scmp.eq.s32.totalorder %s26, 1
      %p170 = por %p168, %p169
      %p171 = scmp.ne.s32.totalorder %s162, %s163
      %p172 = scmp.eq.s32.totalorder %s26, 0
      %p173 = por %p171, %p172
      %p174 = scmp.ne.s32.totalorder %s162, %s163
      %p175 = scmp.eq.s32.totalorder %s27, 1
      %p176 = por %p174, %p175
      %p178 = scmp.ne.s32.totalorder %s163, %s177
      %p179 = scmp.eq.s32.totalorder %s27, 0
      %p180 = por %p178, %p179
      %s181 = ssub.s32 %s21, %s28
      %p182 = scmp.eq.s32.totalorder %s181, 0
      %s184 = sadd.s32 %s183, 1
      %s185 = scalar_select %p182, %s183, %s184
      %p188 = pneg %p182
      %p189 = scmp.eq.s32.totalorder %s21, 1
      %p190 = por %p188, %p189
      %p191 = scmp.ne.s32.totalorder %s183, %s186
      %p192 = scmp.eq.s32.totalorder %s21, 0
      %p193 = por %p191, %p192
      %p194 = scmp.ne.s32.totalorder %s183, %s186
      %p195 = scmp.eq.s32.totalorder %s26, 1
      %p196 = por %p194, %p195
      %p197 = scmp.ne.s32.totalorder %s186, %s187
      %p198 = scmp.eq.s32.totalorder %s26, 0
      %p199 = por %p197, %p198
      %p200 = scmp.ne.s32.totalorder %s186, %s187
      %p201 = scmp.eq.s32.totalorder %s27, 1
      %p202 = por %p200, %p201
      %p204 = scmp.ne.s32.totalorder %s187, %s203
      %p205 = scmp.eq.s32.totalorder %s27, 0
      %p206 = por %p204, %p205
      %p207 = scmp.le.s32.totalorder 1, %s21
      %p208 = scmp.lt.s32.totalorder %s21, 3
      %p209 = pnand %p207, %p208
      %p210 = pneg %p209
      // Predicated region
      $region9: #{tpu_custom_call.1} parent=5 // pred_check
        _
      $region10: #{tpu_custom_call.1} parent=5 // pred_check_branch
        %212 = sbr.rel (%p209) target = $region12
      $region11: #{tpu_custom_call.1} parent=5 // pred_region
        %s213 = ssub.s32 %s21, 1
        // Predicated region
        $region13: #{tpu_custom_call.1} parent=11 // pred_check
          %p214 = pneg %p68
        $region14: #{tpu_custom_call.1} parent=11 // pred_check_branch
          %216 = sbr.rel (%p214) target = $region16
        $region15: #{tpu_custom_call.1} parent=11 // pred_region
          %s218 = ssub.s32 4096, 4096
          %219 = vsyncadd [#allocation6], %s218
          %s220 = sshll.u32 [#allocation5], 4
          %s221 = int_to_ptr.vmem [resolvable:$true] %s220
          %226 = dma.hbm_to_vmem [thread:$0]  %s1, 4096, %s221, [#allocation6], 128, 128, 8
        $region16: #{tpu_custom_call.1} parent=11 // pred_fallthru
          _
        // Predicated region
        $region17: #{tpu_custom_call.1} parent=11 // pred_check
          %p227 = pneg %p89
        $region18: #{tpu_custom_call.1} parent=11 // pred_check_branch
          %229 = sbr.rel (%p227) target = $region20
        $region19: #{tpu_custom_call.1} parent=11 // pred_region
          _
        $region20: #{tpu_custom_call.1} parent=11 // pred_fallthru
          _
        // Predicated region
        $region21: #{tpu_custom_call.1} parent=11 // pred_check
          %p230 = pneg %p110
        $region22: #{tpu_custom_call.1} parent=11 // pred_check_branch
          %232 = sbr.rel (%p230) target = $region24
        $region23: #{tpu_custom_call.1} parent=11 // pred_region
          %s234 = ssub.s32 4096, 4096
          %235 = vsyncadd [#allocation6], %s234
          %s236 = sshll.u32 [#allocation7], 4
          %s237 = int_to_ptr.vmem [resolvable:$true] %s236
          %242 = dma.hbm_to_vmem [thread:$0]  %s3, 4096, %s237, [#allocation6], 128, 128, 8
        $region24: #{tpu_custom_call.1} parent=11 // pred_fallthru
          _
        // Predicated region
        $region25: #{tpu_custom_call.1} parent=11 // pred_check
          %p243 = pneg %p131
        $region26: #{tpu_custom_call.1} parent=11 // pred_check_branch
          %245 = sbr.rel (%p243) target = $region28
        $region27: #{tpu_custom_call.1} parent=11 // pred_region
          _
        $region28: #{tpu_custom_call.1} parent=11 // pred_fallthru
          _
        // Predicated region
        $region29: #{tpu_custom_call.1} parent=11 // pred_check
          %p246 = pneg %p152
        $region30: #{tpu_custom_call.1} parent=11 // pred_check_branch
          %248 = sbr.rel (%p246) target = $region32
        $region31: #{tpu_custom_call.1} parent=11 // pred_region
          %s250 = ssub.s32 2048, 2048
          %251 = vsyncadd [#allocation9], %s250
          %s252 = sshll.u32 [#allocation8], 4
          %s253 = int_to_ptr.vmem [resolvable:$true] %s252
          %258 = dma.hbm_to_vmem [thread:$0]  %s5, 2048, %s253, [#allocation9], 64, 64, 4
        $region32: #{tpu_custom_call.1} parent=11 // pred_fallthru
          _
        // Predicated region
        $region33: #{tpu_custom_call.1} parent=11 // pred_check
          %p259 = pneg %p173
        $region34: #{tpu_custom_call.1} parent=11 // pred_check_branch
          %261 = sbr.rel (%p259) target = $region36
        $region35: #{tpu_custom_call.1} parent=11 // pred_region
          _
        $region36: #{tpu_custom_call.1} parent=11 // pred_fallthru
          _
      $region12: #{tpu_custom_call.1} parent=5 // pred_fallthru
        _
      %p262 = scmp.lt.s32.totalorder %s21, 2
      // Predicated region
      $region37: #{tpu_custom_call.1} parent=5 // pred_check
        %p263 = pneg %p262
      $region38: #{tpu_custom_call.1} parent=5 // pred_check_branch
        %265 = sbr.rel (%p263) target = $region40
      $region39: #{tpu_custom_call.1} parent=5 // pred_region
        // Predicated region
        $region41: #{tpu_custom_call.1} parent=39 // pred_check
          %p266 = pneg %p41
        $region42: #{tpu_custom_call.1} parent=39 // pred_check_branch
          %268 = sbr.rel (%p266) target = $region44
        $region43: #{tpu_custom_call.1} parent=39 // pred_region
          %s269 = sand.u32 %s31, 1
          %s270 = scalar_lea.sflag [#allocation3], %s269
          %s271 = sand.u32 %s31, 1
          %s272 = smul.addr %s271, 512
          %s273 = scalar_lea.vmem [#allocation2], %s272
          %s274 = smul.u32 64, %s21
          %s276 = ssub.s32 8192, 8192
          %277 = vsyncadd %s270, %s276
          %s278 = smul.addr %s274, 2
          %s279 = smul.addr %s278, 64
          %s280 = scalar_lea.hbm %s0, %s279
          %s281 = sshll.u32 %s273, 4
          %s282 = int_to_ptr.vmem [resolvable:$true] %s281
          %287 = dma.hbm_to_vmem [thread:$0]  %s280, 8192, %s282, %s270, 128, 128, 8
        $region44: #{tpu_custom_call.1} parent=39 // pred_fallthru
          _
      $region40: #{tpu_custom_call.1} parent=5 // pred_fallthru
        _
      %p288 = scmp.le.s32.totalorder 1, %s21
      %p289 = scmp.lt.s32.totalorder %s21, 3
      %p290 = pnand %p288, %p289
      %p291 = pneg %p290
      // Predicated region
      $region45: #{tpu_custom_call.1} parent=5 // pred_check
        _
      $region46: #{tpu_custom_call.1} parent=5 // pred_check_branch
        %293 = sbr.rel (%p290) target = $region48
      $region47: #{tpu_custom_call.1} parent=5 // pred_region
        %s294 = ssub.s32 %s21, 1
        %s295 = sand.u32 %s34, 1
        %s296 = scalar_lea.sflag [#allocation3], %s295
        %s297 = sand.u32 %s34, 1
        %s298 = smul.addr %s297, 512
        %s299 = scalar_lea.vmem [#allocation2], %s298
        // Predicated region
        $region49: #{tpu_custom_call.1} parent=47 // pred_check
          %p300 = pneg %p47
        $region50: #{tpu_custom_call.1} parent=47 // pred_check_branch
          %302 = sbr.rel (%p300) target = $region52
        $region51: #{tpu_custom_call.1} parent=47 // pred_region
          %303 = dma.done %s296, 8192
        $region52: #{tpu_custom_call.1} parent=47 // pred_fallthru
          _
        // Predicated region
        $region53: #{tpu_custom_call.1} parent=47 // pred_check
          %p304 = pneg %p68
        $region54: #{tpu_custom_call.1} parent=47 // pred_check_branch
          %306 = sbr.rel (%p304) target = $region56
        $region55: #{tpu_custom_call.1} parent=47 // pred_region
          %307 = dma.done [#allocation6], 4096
        $region56: #{tpu_custom_call.1} parent=47 // pred_fallthru
          _
        // Predicated region
        $region57: #{tpu_custom_call.1} parent=47 // pred_check
          %p308 = pneg %p110
        $region58: #{tpu_custom_call.1} parent=47 // pred_check_branch
          %310 = sbr.rel (%p308) target = $region60
        $region59: #{tpu_custom_call.1} parent=47 // pred_region
          %311 = dma.done [#allocation6], 4096
        $region60: #{tpu_custom_call.1} parent=47 // pred_fallthru
          _
        // Predicated region
        $region61: #{tpu_custom_call.1} parent=47 // pred_check
          %p312 = pneg %p152
        $region62: #{tpu_custom_call.1} parent=47 // pred_check_branch
          %314 = sbr.rel (%p312) target = $region64
        $region63: #{tpu_custom_call.1} parent=47 // pred_region
          %315 = dma.done [#allocation9], 2048
        $region64: #{tpu_custom_call.1} parent=47 // pred_fallthru
          _
        %s316 = sand.u32 %s34, 1
        %s317 = scalar_lea.sflag [#allocation3], %s316
        %s318 = sand.u32 %s34, 1
        %s319 = smul.addr %s318, 512
        %s320 = scalar_lea.vmem [#allocation2], %s319
        %p321 = pneg %p47
        %p322 = pneg %p44
        %p323 = pneg %p68
        %p324 = pneg %p65
        %p325 = pneg %p89
        %p326 = pneg %p86
        %p327 = pneg %p110
        %p328 = pneg %p107
        %p329 = pneg %p131
        %p330 = pneg %p128
        %p331 = pneg %p152
        %p332 = pneg %p149
        %p333 = pneg %p173
        %p334 = pneg %p170
        %p335 = pneg %p199
        %p336 = pneg %p196
        %s337 = sand.u32 %s186, 1
        %s338 = scalar_lea.sflag [#allocation4], %s337
        %s339 = sand.u32 %s186, 1
        %s340 = smul.addr %s339, 512
        %s341 = scalar_lea.vmem [#allocation10], %s340
        %s342 = smul.u32 64, %s26
        %s343 = smul.u32 64, %s26
        %v345 = vld [vmem:[%s299] sm:$0xff]
        %v346 = vld [vmem:[%s299 + $0x8] sm:$0xff]
        %v347 = vld [vmem:[%s299 + $0x10] sm:$0xff]
        %v348 = vld [vmem:[%s299 + $0x18] sm:$0xff]
        %v349 = vld [vmem:[%s299 + $0x20] sm:$0xff]
        %v350 = vld [vmem:[%s299 + $0x28] sm:$0xff]
        %v351 = vld [vmem:[%s299 + $0x30] sm:$0xff]
        %v352 = vld [vmem:[%s299 + $0x38] sm:$0xff]
        %v353 = vld [vmem:[%s299 + $0x40] sm:$0xff]
        %v354 = vld [vmem:[%s299 + $0x48] sm:$0xff]
        %v355 = vld [vmem:[%s299 + $0x50] sm:$0xff]
        %v356 = vld [vmem:[%s299 + $0x58] sm:$0xff]
        %v357 = vld [vmem:[%s299 + $0x60] sm:$0xff]
        %v358 = vld [vmem:[%s299 + $0x68] sm:$0xff]
        %v359 = vld [vmem:[%s299 + $0x70] sm:$0xff]
        %v360 = vld [vmem:[%s299 + $0x78] sm:$0xff]
        %v361 = vld [vmem:[%s299 + $0x80] sm:$0xff]
        %v362 = vld [vmem:[%s299 + $0x88] sm:$0xff]
        %v363 = vld [vmem:[%s299 + $0x90] sm:$0xff]
        %v364 = vld [vmem:[%s299 + $0x98] sm:$0xff]
        %v365 = vld [vmem:[%s299 + $0xa0] sm:$0xff]
        %v366 = vld [vmem:[%s299 + $0xa8] sm:$0xff]
        %v367 = vld [vmem:[%s299 + $0xb0] sm:$0xff]
        %v368 = vld [vmem:[%s299 + $0xb8] sm:$0xff]
        %v369 = vld [vmem:[%s299 + $0xc0] sm:$0xff]
        %v370 = vld [vmem:[%s299 + $0xc8] sm:$0xff]
        %v371 = vld [vmem:[%s299 + $0xd0] sm:$0xff]
        %v372 = vld [vmem:[%s299 + $0xd8] sm:$0xff]
        %v373 = vld [vmem:[%s299 + $0xe0] sm:$0xff]
        %v374 = vld [vmem:[%s299 + $0xe8] sm:$0xff]
        %v375 = vld [vmem:[%s299 + $0xf0] sm:$0xff]
        %v376 = vld [vmem:[%s299 + $0xf8] sm:$0xff]
        %v377 = vld [vmem:[%s299 + $0x100] sm:$0xff]
        %v378 = vld [vmem:[%s299 + $0x108] sm:$0xff]
        %v379 = vld [vmem:[%s299 + $0x110] sm:$0xff]
        %v380 = vld [vmem:[%s299 + $0x118] sm:$0xff]
        %v381 = vld [vmem:[%s299 + $0x120] sm:$0xff]
        %v382 = vld [vmem:[%s299 + $0x128] sm:$0xff]
        %v383 = vld [vmem:[%s299 + $0x130] sm:$0xff]
        %v384 = vld [vmem:[%s299 + $0x138] sm:$0xff]
        %v385 = vld [vmem:[%s299 + $0x140] sm:$0xff]
        %v386 = vld [vmem:[%s299 + $0x148] sm:$0xff]
        %v387 = vld [vmem:[%s299 + $0x150] sm:$0xff]
        %v388 = vld [vmem:[%s299 + $0x158] sm:$0xff]
        %v389 = vld [vmem:[%s299 + $0x160] sm:$0xff]
        %v390 = vld [vmem:[%s299 + $0x168] sm:$0xff]
        %v391 = vld [vmem:[%s299 + $0x170] sm:$0xff]
        %v392 = vld [vmem:[%s299 + $0x178] sm:$0xff]
        %v393 = vld [vmem:[%s299 + $0x180] sm:$0xff]
        %v394 = vld [vmem:[%s299 + $0x188] sm:$0xff]
        %v395 = vld [vmem:[%s299 + $0x190] sm:$0xff]
        %v396 = vld [vmem:[%s299 + $0x198] sm:$0xff]
        %v397 = vld [vmem:[%s299 + $0x1a0] sm:$0xff]
        %v398 = vld [vmem:[%s299 + $0x1a8] sm:$0xff]
        %v399 = vld [vmem:[%s299 + $0x1b0] sm:$0xff]
        %v400 = vld [vmem:[%s299 + $0x1b8] sm:$0xff]
        %v401 = vld [vmem:[%s299 + $0x1c0] sm:$0xff]
        %v402 = vld [vmem:[%s299 + $0x1c8] sm:$0xff]
        %v403 = vld [vmem:[%s299 + $0x1d0] sm:$0xff]
        %v404 = vld [vmem:[%s299 + $0x1d8] sm:$0xff]
        %v405 = vld [vmem:[%s299 + $0x1e0] sm:$0xff]
        %v406 = vld [vmem:[%s299 + $0x1e8] sm:$0xff]
        %v407 = vld [vmem:[%s299 + $0x1f0] sm:$0xff]
        %v408 = vld [vmem:[%s299 + $0x1f8] sm:$0xff]
        %v409 = vld [vmem:[#allocation5] sm:$0xff]
        %v410 = vld [vmem:[#allocation5 + $0x8] sm:$0xff]
        %v411 = vld [vmem:[#allocation5 + $0x10] sm:$0xff]
        %v412 = vld [vmem:[#allocation5 + $0x18] sm:$0xff]
        %v413 = vld [vmem:[#allocation5 + $0x20] sm:$0xff]
        %v414 = vld [vmem:[#allocation5 + $0x28] sm:$0xff]
        %v415 = vld [vmem:[#allocation5 + $0x30] sm:$0xff]
        %v416 = vld [vmem:[#allocation5 + $0x38] sm:$0xff]
        %v417 = vld [vmem:[#allocation5 + $0x40] sm:$0xff]
        %v418 = vld [vmem:[#allocation5 + $0x48] sm:$0xff]
        %v419 = vld [vmem:[#allocation5 + $0x50] sm:$0xff]
        %v420 = vld [vmem:[#allocation5 + $0x58] sm:$0xff]
        %v421 = vld [vmem:[#allocation5 + $0x60] sm:$0xff]
        %v422 = vld [vmem:[#allocation5 + $0x68] sm:$0xff]
        %v423 = vld [vmem:[#allocation5 + $0x70] sm:$0xff]
        %v424 = vld [vmem:[#allocation5 + $0x78] sm:$0xff]
        %v425 = vld [vmem:[#allocation5 + $0x80] sm:$0xff]
        %v426 = vld [vmem:[#allocation5 + $0x88] sm:$0xff]
        %v427 = vld [vmem:[#allocation5 + $0x90] sm:$0xff]
        %v428 = vld [vmem:[#allocation5 + $0x98] sm:$0xff]
        %v429 = vld [vmem:[#allocation5 + $0xa0] sm:$0xff]
        %v430 = vld [vmem:[#allocation5 + $0xa8] sm:$0xff]
        %v431 = vld [vmem:[#allocation5 + $0xb0] sm:$0xff]
        %v432 = vld [vmem:[#allocation5 + $0xb8] sm:$0xff]
        %v433 = vld [vmem:[#allocation5 + $0xc0] sm:$0xff]
        %v434 = vld [vmem:[#allocation5 + $0xc8] sm:$0xff]
        %v435 = vld [vmem:[#allocation5 + $0xd0] sm:$0xff]
        %v436 = vld [vmem:[#allocation5 + $0xd8] sm:$0xff]
        %v437 = vld [vmem:[#allocation5 + $0xe0] sm:$0xff]
        %v438 = vld [vmem:[#allocation5 + $0xe8] sm:$0xff]
        %v439 = vld [vmem:[#allocation5 + $0xf0] sm:$0xff]
        %v440 = vld [vmem:[#allocation5 + $0xf8] sm:$0xff]
        %v441 = vld [vmem:[%s2] sm:$0x3]
        %v443 = vlaneseq
        %v444 = vshrl.u32 %v443, 7
        %v445 = vsub.s32 0, %v444
        %v446 = vrot.slane %v441, %v445
        %v447 = vlaneseq
        %v448 = vshrl.u32 %v447, 7
        %v449 = vsub.s32 1, %v448
        %v450 = vrot.slane %v441, %v449
        %v517 = vunpack.c.l.b16 %v345
        %v518 = vunpack.c.h.b16 %v345
        %v519 = vunpack.c.l.b16 %v346
        %v520 = vunpack.c.h.b16 %v346
        %v521 = vunpack.c.l.b16 %v347
        %v522 = vunpack.c.h.b16 %v347
        %v523 = vunpack.c.l.b16 %v348
        %v524 = vunpack.c.h.b16 %v348
        %v525 = vunpack.c.l.b16 %v349
        %v526 = vunpack.c.h.b16 %v349
        %v527 = vunpack.c.l.b16 %v350
        %v528 = vunpack.c.h.b16 %v350
        %v529 = vunpack.c.l.b16 %v351
        %v530 = vunpack.c.h.b16 %v351
        %v531 = vunpack.c.l.b16 %v352
        %v532 = vunpack.c.h.b16 %v352
        %v533 = vunpack.c.l.b16 %v353
        %v534 = vunpack.c.h.b16 %v353
        %v535 = vunpack.c.l.b16 %v354
        %v536 = vunpack.c.h.b16 %v354
        %v537 = vunpack.c.l.b16 %v355
        %v538 = vunpack.c.h.b16 %v355
        %v539 = vunpack.c.l.b16 %v356
        %v540 = vunpack.c.h.b16 %v356
        %v541 = vunpack.c.l.b16 %v357
        %v542 = vunpack.c.h.b16 %v357
        %v543 = vunpack.c.l.b16 %v358
        %v544 = vunpack.c.h.b16 %v358
        %v545 = vunpack.c.l.b16 %v359
        %v546 = vunpack.c.h.b16 %v359
        %v547 = vunpack.c.l.b16 %v360
        %v548 = vunpack.c.h.b16 %v360
        %v549 = vunpack.c.l.b16 %v361
        %v550 = vunpack.c.h.b16 %v361
        %v551 = vunpack.c.l.b16 %v362
        %v552 = vunpack.c.h.b16 %v362
        %v553 = vunpack.c.l.b16 %v363
        %v554 = vunpack.c.h.b16 %v363
        %v555 = vunpack.c.l.b16 %v364
        %v556 = vunpack.c.h.b16 %v364
        %v557 = vunpack.c.l.b16 %v365
        %v558 = vunpack.c.h.b16 %v365
        %v559 = vunpack.c.l.b16 %v366
        %v560 = vunpack.c.h.b16 %v366
        %v561 = vunpack.c.l.b16 %v367
        %v562 = vunpack.c.h.b16 %v367
        %v563 = vunpack.c.l.b16 %v368
        %v564 = vunpack.c.h.b16 %v368
        %v565 = vunpack.c.l.b16 %v369
        %v566 = vunpack.c.h.b16 %v369
        %v567 = vunpack.c.l.b16 %v370
        %v568 = vunpack.c.h.b16 %v370
        %v569 = vunpack.c.l.b16 %v371
        %v570 = vunpack.c.h.b16 %v371
        %v571 = vunpack.c.l.b16 %v372
        %v572 = vunpack.c.h.b16 %v372
        %v573 = vunpack.c.l.b16 %v373
        %v574 = vunpack.c.h.b16 %v373
        %v575 = vunpack.c.l.b16 %v374
        %v576 = vunpack.c.h.b16 %v374
        %v577 = vunpack.c.l.b16 %v375
        %v578 = vunpack.c.h.b16 %v375
        %v579 = vunpack.c.l.b16 %v376
        %v580 = vunpack.c.h.b16 %v376
        %v581 = vunpack.c.l.b16 %v377
        %v582 = vunpack.c.h.b16 %v377
        %v583 = vunpack.c.l.b16 %v378
        %v584 = vunpack.c.h.b16 %v378
        %v585 = vunpack.c.l.b16 %v379
        %v586 = vunpack.c.h.b16 %v379
        %v587 = vunpack.c.l.b16 %v380
        %v588 = vunpack.c.h.b16 %v380
        %v589 = vunpack.c.l.b16 %v381
        %v590 = vunpack.c.h.b16 %v381
        %v591 = vunpack.c.l.b16 %v382
        %v592 = vunpack.c.h.b16 %v382
        %v593 = vunpack.c.l.b16 %v383
        %v594 = vunpack.c.h.b16 %v383
        %v595 = vunpack.c.l.b16 %v384
        %v596 = vunpack.c.h.b16 %v384
        %v597 = vunpack.c.l.b16 %v385
        %v598 = vunpack.c.h.b16 %v385
        %v599 = vunpack.c.l.b16 %v386
        %v600 = vunpack.c.h.b16 %v386
        %v601 = vunpack.c.l.b16 %v387
        %v602 = vunpack.c.h.b16 %v387
        %v603 = vunpack.c.l.b16 %v388
        %v604 = vunpack.c.h.b16 %v388
        %v605 = vunpack.c.l.b16 %v389
        %v606 = vunpack.c.h.b16 %v389
        %v607 = vunpack.c.l.b16 %v390
        %v608 = vunpack.c.h.b16 %v390
        %v609 = vunpack.c.l.b16 %v391
        %v610 = vunpack.c.h.b16 %v391
        %v611 = vunpack.c.l.b16 %v392
        %v612 = vunpack.c.h.b16 %v392
        %v613 = vunpack.c.l.b16 %v393
        %v614 = vunpack.c.h.b16 %v393
        %v615 = vunpack.c.l.b16 %v394
        %v616 = vunpack.c.h.b16 %v394
        %v617 = vunpack.c.l.b16 %v395
        %v618 = vunpack.c.h.b16 %v395
        %v619 = vunpack.c.l.b16 %v396
        %v620 = vunpack.c.h.b16 %v396
        %v621 = vunpack.c.l.b16 %v397
        %v622 = vunpack.c.h.b16 %v397
        %v623 = vunpack.c.l.b16 %v398
        %v624 = vunpack.c.h.b16 %v398
        %v625 = vunpack.c.l.b16 %v399
        %v626 = vunpack.c.h.b16 %v399
        %v627 = vunpack.c.l.b16 %v400
        %v628 = vunpack.c.h.b16 %v400
        %v629 = vunpack.c.l.b16 %v401
        %v630 = vunpack.c.h.b16 %v401
        %v631 = vunpack.c.l.b16 %v402
        %v632 = vunpack.c.h.b16 %v402
        %v633 = vunpack.c.l.b16 %v403
        %v634 = vunpack.c.h.b16 %v403
        %v635 = vunpack.c.l.b16 %v404
        %v636 = vunpack.c.h.b16 %v404
        %v637 = vunpack.c.l.b16 %v405
        %v638 = vunpack.c.h.b16 %v405
        %v639 = vunpack.c.l.b16 %v406
        %v640 = vunpack.c.h.b16 %v406
        %v641 = vunpack.c.l.b16 %v407
        %v642 = vunpack.c.h.b16 %v407
        %v643 = vunpack.c.l.b16 %v408
        %v644 = vunpack.c.h.b16 %v408
        %v645 = vpack.c.b16 %v519, %v517
        %v646 = vpack.c.b16 %v520, %v518
        %v647 = vpack.c.b16 %v523, %v521
        %v648 = vpack.c.b16 %v524, %v522
        %v649 = vpack.c.b16 %v527, %v525
        %v650 = vpack.c.b16 %v528, %v526
        %v651 = vpack.c.b16 %v531, %v529
        %v652 = vpack.c.b16 %v532, %v530
        %v653 = vpack.c.b16 %v535, %v533
        %v654 = vpack.c.b16 %v536, %v534
        %v655 = vpack.c.b16 %v539, %v537
        %v656 = vpack.c.b16 %v540, %v538
        %v657 = vpack.c.b16 %v543, %v541
        %v658 = vpack.c.b16 %v544, %v542
        %v659 = vpack.c.b16 %v547, %v545
        %v660 = vpack.c.b16 %v548, %v546
        %v661 = vpack.c.b16 %v551, %v549
        %v662 = vpack.c.b16 %v552, %v550
        %v663 = vpack.c.b16 %v555, %v553
        %v664 = vpack.c.b16 %v556, %v554
        %v665 = vpack.c.b16 %v559, %v557
        %v666 = vpack.c.b16 %v560, %v558
        %v667 = vpack.c.b16 %v563, %v561
        %v668 = vpack.c.b16 %v564, %v562
        %v669 = vpack.c.b16 %v567, %v565
        %v670 = vpack.c.b16 %v568, %v566
        %v671 = vpack.c.b16 %v571, %v569
        %v672 = vpack.c.b16 %v572, %v570
        %v673 = vpack.c.b16 %v575, %v573
        %v674 = vpack.c.b16 %v576, %v574
        %v675 = vpack.c.b16 %v579, %v577
        %v676 = vpack.c.b16 %v580, %v578
        %v677 = vpack.c.b16 %v583, %v581
        %v678 = vpack.c.b16 %v584, %v582
        %v679 = vpack.c.b16 %v587, %v585
        %v680 = vpack.c.b16 %v588, %v586
        %v681 = vpack.c.b16 %v591, %v589
        %v682 = vpack.c.b16 %v592, %v590
        %v683 = vpack.c.b16 %v595, %v593
        %v684 = vpack.c.b16 %v596, %v594
        %v685 = vpack.c.b16 %v599, %v597
        %v686 = vpack.c.b16 %v600, %v598
        %v687 = vpack.c.b16 %v603, %v601
        %v688 = vpack.c.b16 %v604, %v602
        %v689 = vpack.c.b16 %v607, %v605
        %v690 = vpack.c.b16 %v608, %v606
        %v691 = vpack.c.b16 %v611, %v609
        %v692 = vpack.c.b16 %v612, %v610
        %v693 = vpack.c.b16 %v615, %v613
        %v694 = vpack.c.b16 %v616, %v614
        %v695 = vpack.c.b16 %v619, %v617
        %v696 = vpack.c.b16 %v620, %v618
        %v697 = vpack.c.b16 %v623, %v621
        %v698 = vpack.c.b16 %v624, %v622
        %v699 = vpack.c.b16 %v627, %v625
        %v700 = vpack.c.b16 %v628, %v626
        %v701 = vpack.c.b16 %v631, %v629
        %v702 = vpack.c.b16 %v632, %v630
        %v703 = vpack.c.b16 %v635, %v633
        %v704 = vpack.c.b16 %v636, %v634
        %v705 = vpack.c.b16 %v639, %v637
        %v706 = vpack.c.b16 %v640, %v638
        %v707 = vpack.c.b16 %v643, %v641
        %v708 = vpack.c.b16 %v644, %v642
        %v805 = vunpack.c.l.b16 %v409
        %v806 = vunpack.c.h.b16 %v409
        %v807 = vunpack.c.l.b16 %v410
        %v808 = vunpack.c.h.b16 %v410
        %v809 = vunpack.c.l.b16 %v411
        %v810 = vunpack.c.h.b16 %v411
        %v811 = vunpack.c.l.b16 %v412
        %v812 = vunpack.c.h.b16 %v412
        %v813 = vunpack.c.l.b16 %v413
        %v814 = vunpack.c.h.b16 %v413
        %v815 = vunpack.c.l.b16 %v414
        %v816 = vunpack.c.h.b16 %v414
        %v817 = vunpack.c.l.b16 %v415
        %v818 = vunpack.c.h.b16 %v415
        %v819 = vunpack.c.l.b16 %v416
        %v820 = vunpack.c.h.b16 %v416
        %v821 = vunpack.c.l.b16 %v417
        %v822 = vunpack.c.h.b16 %v417
        %v823 = vunpack.c.l.b16 %v418
        %v824 = vunpack.c.h.b16 %v418
        %v825 = vunpack.c.l.b16 %v419
        %v826 = vunpack.c.h.b16 %v419
        %v827 = vunpack.c.l.b16 %v420
        %v828 = vunpack.c.h.b16 %v420
        %v829 = vunpack.c.l.b16 %v421
        %v830 = vunpack.c.h.b16 %v421
        %v831 = vunpack.c.l.b16 %v422
        %v832 = vunpack.c.h.b16 %v422
        %v833 = vunpack.c.l.b16 %v423
        %v834 = vunpack.c.h.b16 %v423
        %v835 = vunpack.c.l.b16 %v424
        %v836 = vunpack.c.h.b16 %v424
        %v837 = vunpack.c.l.b16 %v425
        %v838 = vunpack.c.h.b16 %v425
        %v839 = vunpack.c.l.b16 %v426
        %v840 = vunpack.c.h.b16 %v426
        %v841 = vunpack.c.l.b16 %v427
        %v842 = vunpack.c.h.b16 %v427
        %v843 = vunpack.c.l.b16 %v428
        %v844 = vunpack.c.h.b16 %v428
        %v845 = vunpack.c.l.b16 %v429
        %v846 = vunpack.c.h.b16 %v429
        %v847 = vunpack.c.l.b16 %v430
        %v848 = vunpack.c.h.b16 %v430
        %v849 = vunpack.c.l.b16 %v431
        %v850 = vunpack.c.h.b16 %v431
        %v851 = vunpack.c.l.b16 %v432
        %v852 = vunpack.c.h.b16 %v432
        %v853 = vunpack.c.l.b16 %v433
        %v854 = vunpack.c.h.b16 %v433
        %v855 = vunpack.c.l.b16 %v434
        %v856 = vunpack.c.h.b16 %v434
        %v857 = vunpack.c.l.b16 %v435
        %v858 = vunpack.c.h.b16 %v435
        %v859 = vunpack.c.l.b16 %v436
        %v860 = vunpack.c.h.b16 %v436
        %v861 = vunpack.c.l.b16 %v437
        %v862 = vunpack.c.h.b16 %v437
        %v863 = vunpack.c.l.b16 %v438
        %v864 = vunpack.c.h.b16 %v438
        %v865 = vunpack.c.l.b16 %v439
        %v866 = vunpack.c.h.b16 %v439
        %v867 = vunpack.c.l.b16 %v440
        %v868 = vunpack.c.h.b16 %v440
        %v869 = vpack.c.b16 %v807, %v805
        %v870 = vpack.c.b16 %v808, %v806
        %v871 = vpack.c.b16 %v811, %v809
        %v872 = vpack.c.b16 %v812, %v810
        %v873 = vpack.c.b16 %v815, %v813
        %v874 = vpack.c.b16 %v816, %v814
        %v875 = vpack.c.b16 %v819, %v817
        %v876 = vpack.c.b16 %v820, %v818
        %v877 = vpack.c.b16 %v823, %v821
        %v878 = vpack.c.b16 %v824, %v822
        %v879 = vpack.c.b16 %v827, %v825
        %v880 = vpack.c.b16 %v828, %v826
        %v881 = vpack.c.b16 %v831, %v829
        %v882 = vpack.c.b16 %v832, %v830
        %v883 = vpack.c.b16 %v835, %v833
        %v884 = vpack.c.b16 %v836, %v834
        %v885 = vpack.c.b16 %v839, %v837
        %v886 = vpack.c.b16 %v840, %v838
        %v887 = vpack.c.b16 %v843, %v841
        %v888 = vpack.c.b16 %v844, %v842
        %v889 = vpack.c.b16 %v847, %v845
        %v890 = vpack.c.b16 %v848, %v846
        %v891 = vpack.c.b16 %v851, %v849
        %v892 = vpack.c.b16 %v852, %v850
        %v893 = vpack.c.b16 %v855, %v853
        %v894 = vpack.c.b16 %v856, %v854
        %v895 = vpack.c.b16 %v859, %v857
        %v896 = vpack.c.b16 %v860, %v858
        %v897 = vpack.c.b16 %v863, %v861
        %v898 = vpack.c.b16 %v864, %v862
        %v899 = vpack.c.b16 %v867, %v865
        %v900 = vpack.c.b16 %v868, %v866
        %933 = vmatprep.subr.bf16.mxu0 %v870
        %934 = vmatpush1.bf16.msra.mxu0 %v869
        %935 = vmatprep.subr.bf16.mxu0 %v872
        %936 = vmatpush1.bf16.msra.mxu0 %v871
        %937 = vmatprep.subr.bf16.mxu0 %v874
        %938 = vmatpush1.bf16.msra.mxu0 %v873
        %939 = vmatprep.subr.bf16.mxu0 %v876
        %940 = vmatpush1.bf16.msra.mxu0 %v875
        %941 = vmatprep.subr.bf16.mxu0 %v878
        %942 = vmatpush1.bf16.msra.mxu0 %v877
        %943 = vmatprep.subr.bf16.mxu0 %v880
        %944 = vmatpush1.bf16.msra.mxu0 %v879
        %945 = vmatprep.subr.bf16.mxu0 %v882
        %946 = vmatpush1.bf16.msra.mxu0 %v881
        %947 = vmatprep.subr.bf16.mxu0 %v884
        %948 = vmatpush1.bf16.msra.mxu0 %v883
        %949 = vmatprep.subr.bf16.mxu0 %v886
        %950 = vmatpush1.bf16.msra.mxu0 %v885
        %951 = vmatprep.subr.bf16.mxu0 %v888
        %952 = vmatpush1.bf16.msra.mxu0 %v887
        %953 = vmatprep.subr.bf16.mxu0 %v890
        %954 = vmatpush1.bf16.msra.mxu0 %v889
        %955 = vmatprep.subr.bf16.mxu0 %v892
        %956 = vmatpush1.bf16.msra.mxu0 %v891
        %957 = vmatprep.subr.bf16.mxu0 %v894
        %958 = vmatpush1.bf16.msra.mxu0 %v893
        %959 = vmatprep.subr.bf16.mxu0 %v896
        %960 = vmatpush1.bf16.msra.mxu0 %v895
        %961 = vmatprep.subr.bf16.mxu0 %v898
        %962 = vmatpush1.bf16.msra.mxu0 %v897
        %963 = vmatprep.subr.bf16.mxu0 %v900
        %964 = vmatpush1.bf16.msra.mxu0 %v899
        %965 = vmatprep.mubr.bf16.mxu0 %v646
        %966 = vmatmul.mubr.bf16.gmra.mrb[0].mxu0 %v645
        %v967 = vpop.f32.mrb[0].mxu0
        %v968 = vadd.f32 %v446, %v967
        %v969 = vpop.f32.mrb[0].mxu0
        %v970 = vadd.f32 %v450, %v969
        %v971 = vpop.f32.mrb[0].mxu0
        %v972 = vadd.f32 %v446, %v971
        %v973 = vpop.f32.mrb[0].mxu0
        %v974 = vadd.f32 %v450, %v973
        %975 = vmatprep.mubr.bf16.mxu0 %v648
        %976 = vmatmul.mubr.bf16.gmra.mrb[0].mxu0 %v647
        %v977 = vpop.f32.mrb[0].mxu0
        %v978 = vadd.f32 %v446, %v977
        %v979 = vpop.f32.mrb[0].mxu0
        %v980 = vadd.f32 %v450, %v979
        %v981 = vpop.f32.mrb[0].mxu0
        %v982 = vadd.f32 %v446, %v981
        %v983 = vpop.f32.mrb[0].mxu0
        %v984 = vadd.f32 %v450, %v983
        %985 = vmatprep.mubr.bf16.mxu0 %v650
        %986 = vmatmul.mubr.bf16.gmra.mrb[0].mxu0 %v649
        %v987 = vpop.f32.mrb[0].mxu0
        %v988 = vadd.f32 %v446, %v987
        %v989 = vpop.f32.mrb[0].mxu0
        %v990 = vadd.f32 %v450, %v989
        %v991 = vpop.f32.mrb[0].mxu0
        %v992 = vadd.f32 %v446, %v991
        %v993 = vpop.f32.mrb[0].mxu0
        %v994 = vadd.f32 %v450, %v993
        %995 = vmatprep.mubr.bf16.mxu0 %v652
        %996 = vmatmul.mubr.bf16.gmra.mrb[0].mxu0 %v651
        %v997 = vpop.f32.mrb[0].mxu0
        %v998 = vadd.f32 %v446, %v997
        %v999 = vpop.f32.mrb[0].mxu0
        %v1000 = vadd.f32 %v450, %v999
        %v1001 = vpop.f32.mrb[0].mxu0
        %v1002 = vadd.f32 %v446, %v1001
        %v1003 = vpop.f32.mrb[0].mxu0
        %v1004 = vadd.f32 %v450, %v1003
        %1005 = vmatprep.mubr.bf16.mxu0 %v654
        %1006 = vmatmul.mubr.bf16.gmra.mrb[0].mxu0 %v653
        %v1007 = vpop.f32.mrb[0].mxu0
        %v1008 = vadd.f32 %v446, %v1007
        %v1009 = vpop.f32.mrb[0].mxu0
        %v1010 = vadd.f32 %v450, %v1009
        %v1011 = vpop.f32.mrb[0].mxu0
        %v1012 = vadd.f32 %v446, %v1011
        %v1013 = vpop.f32.mrb[0].mxu0
        %v1014 = vadd.f32 %v450, %v1013
        %1015 = vmatprep.mubr.bf16.mxu0 %v656
        %1016 = vmatmul.mubr.bf16.gmra.mrb[0].mxu0 %v655
        %v1017 = vpop.f32.mrb[0].mxu0
        %v1018 = vadd.f32 %v446, %v1017
        %v1019 = vpop.f32.mrb[0].mxu0
        %v1020 = vadd.f32 %v450, %v1019
        %v1021 = vpop.f32.mrb[0].mxu0
        %v1022 = vadd.f32 %v446, %v1021
        %v1023 = vpop.f32.mrb[0].mxu0
        %v1024 = vadd.f32 %v450, %v1023
        %1025 = vmatprep.mubr.bf16.mxu0 %v658
        %1026 = vmatmul.mubr.bf16.gmra.mrb[0].mxu0 %v657
        %v1027 = vpop.f32.mrb[0].mxu0
        %v1028 = vadd.f32 %v446, %v1027
        %v1029 = vpop.f32.mrb[0].mxu0
        %v1030 = vadd.f32 %v450, %v1029
        %v1031 = vpop.f32.mrb[0].mxu0
        %v1032 = vadd.f32 %v446, %v1031
        %v1033 = vpop.f32.mrb[0].mxu0
        %v1034 = vadd.f32 %v450, %v1033
        %1035 = vmatprep.mubr.bf16.mxu0 %v660
        %1036 = vmatmul.mubr.bf16.gmra.mrb[0].mxu0 %v659
        %v1037 = vpop.f32.mrb[0].mxu0
        %v1038 = vadd.f32 %v446, %v1037
        %v1039 = vpop.f32.mrb[0].mxu0
        %v1040 = vadd.f32 %v450, %v1039
        %v1041 = vpop.f32.mrb[0].mxu0
        %v1042 = vadd.f32 %v446, %v1041
        %v1043 = vpop.f32.mrb[0].mxu0
        %v1044 = vadd.f32 %v450, %v1043
        %1045 = vmatprep.mubr.bf16.mxu0 %v662
        %1046 = vmatmul.mubr.bf16.gmra.mrb[0].mxu0 %v661
        %v1047 = vpop.f32.mrb[0].mxu0
        %v1048 = vadd.f32 %v446, %v1047
        %v1049 = vpop.f32.mrb[0].mxu0
        %v1050 = vadd.f32 %v450, %v1049
        %v1051 = vpop.f32.mrb[0].mxu0
        %v1052 = vadd.f32 %v446, %v1051
        %v1053 = vpop.f32.mrb[0].mxu0
        %v1054 = vadd.f32 %v450, %v1053
        %1055 = vmatprep.mubr.bf16.mxu0 %v664
        %1056 = vmatmul.mubr.bf16.gmra.mrb[0].mxu0 %v663
        %v1057 = vpop.f32.mrb[0].mxu0
        %v1058 = vadd.f32 %v446, %v1057
        %v1059 = vpop.f32.mrb[0].mxu0
        %v1060 = vadd.f32 %v450, %v1059
        %v1061 = vpop.f32.mrb[0].mxu0
        %v1062 = vadd.f32 %v446, %v1061
        %v1063 = vpop.f32.mrb[0].mxu0
        %v1064 = vadd.f32 %v450, %v1063
        %1065 = vmatprep.mubr.bf16.mxu0 %v666
        %1066 = vmatmul.mubr.bf16.gmra.mrb[0].mxu0 %v665
        %v1067 = vpop.f32.mrb[0].mxu0
        %v1068 = vadd.f32 %v446, %v1067
        %v1069 = vpop.f32.mrb[0].mxu0
        %v1070 = vadd.f32 %v450, %v1069
        %v1071 = vpop.f32.mrb[0].mxu0
        %v1072 = vadd.f32 %v446, %v1071
        %v1073 = vpop.f32.mrb[0].mxu0
        %v1074 = vadd.f32 %v450, %v1073
        %1075 = vmatprep.mubr.bf16.mxu0 %v668
        %1076 = vmatmul.mubr.bf16.gmra.mrb[0].mxu0 %v667
        %v1077 = vpop.f32.mrb[0].mxu0
        %v1078 = vadd.f32 %v446, %v1077
        %v1079 = vpop.f32.mrb[0].mxu0
        %v1080 = vadd.f32 %v450, %v1079
        %v1081 = vpop.f32.mrb[0].mxu0
        %v1082 = vadd.f32 %v446, %v1081
        %v1083 = vpop.f32.mrb[0].mxu0
        %v1084 = vadd.f32 %v450, %v1083
        %1085 = vmatprep.mubr.bf16.mxu0 %v670
        %1086 = vmatmul.mubr.bf16.gmra.mrb[0].mxu0 %v669
        %v1087 = vpop.f32.mrb[0].mxu0
        %v1088 = vadd.f32 %v446, %v1087
        %v1089 = vpop.f32.mrb[0].mxu0
        %v1090 = vadd.f32 %v450, %v1089
        %v1091 = vpop.f32.mrb[0].mxu0
        %v1092 = vadd.f32 %v446, %v1091
        %v1093 = vpop.f32.mrb[0].mxu0
        %v1094 = vadd.f32 %v450, %v1093
        %1095 = vmatprep.mubr.bf16.mxu0 %v672
        %1096 = vmatmul.mubr.bf16.gmra.mrb[0].mxu0 %v671
        %v1097 = vpop.f32.mrb[0].mxu0
        %v1098 = vadd.f32 %v446, %v1097
        %v1099 = vpop.f32.mrb[0].mxu0
        %v1100 = vadd.f32 %v450, %v1099
        %v1101 = vpop.f32.mrb[0].mxu0
        %v1102 = vadd.f32 %v446, %v1101
        %v1103 = vpop.f32.mrb[0].mxu0
        %v1104 = vadd.f32 %v450, %v1103
        %1105 = vmatprep.mubr.bf16.mxu0 %v674
        %1106 = vmatmul.mubr.bf16.gmra.mrb[0].mxu0 %v673
        %v1107 = vpop.f32.mrb[0].mxu0
        %v1108 = vadd.f32 %v446, %v1107
        %v1109 = vpop.f32.mrb[0].mxu0
        %v1110 = vadd.f32 %v450, %v1109
        %v1111 = vpop.f32.mrb[0].mxu0
        %v1112 = vadd.f32 %v446, %v1111
        %v1113 = vpop.f32.mrb[0].mxu0
        %v1114 = vadd.f32 %v450, %v1113
        %1115 = vmatprep.mubr.bf16.mxu0 %v676
        %1116 = vmatmul.mubr.bf16.gmra.mrb[0].mxu0 %v675
        %v1117 = vpop.f32.mrb[0].mxu0
        %v1118 = vadd.f32 %v446, %v1117
        %v1119 = vpop.f32.mrb[0].mxu0
        %v1120 = vadd.f32 %v450, %v1119
        %v1121 = vpop.f32.mrb[0].mxu0
        %v1122 = vadd.f32 %v446, %v1121
        %v1123 = vpop.f32.mrb[0].mxu0
        %v1124 = vadd.f32 %v450, %v1123
        %1125 = vmatprep.mubr.bf16.mxu0 %v678
        %1126 = vmatmul.mubr.bf16.gmra.mrb[0].mxu0 %v677
        %v1127 = vpop.f32.mrb[0].mxu0
        %v1128 = vadd.f32 %v446, %v1127
        %v1129 = vpop.f32.mrb[0].mxu0
        %v1130 = vadd.f32 %v450, %v1129
        %v1131 = vpop.f32.mrb[0].mxu0
        %v1132 = vadd.f32 %v446, %v1131
        %v1133 = vpop.f32.mrb[0].mxu0
        %v1134 = vadd.f32 %v450, %v1133
        %1135 = vmatprep.mubr.bf16.mxu0 %v680
        %1136 = vmatmul.mubr.bf16.gmra.mrb[0].mxu0 %v679
        %v1137 = vpop.f32.mrb[0].mxu0
        %v1138 = vadd.f32 %v446, %v1137
        %v1139 = vpop.f32.mrb[0].mxu0
        %v1140 = vadd.f32 %v450, %v1139
        %v1141 = vpop.f32.mrb[0].mxu0
        %v1142 = vadd.f32 %v446, %v1141
        %v1143 = vpop.f32.mrb[0].mxu0
        %v1144 = vadd.f32 %v450, %v1143
        %1145 = vmatprep.mubr.bf16.mxu0 %v682
        %1146 = vmatmul.mubr.bf16.gmra.mrb[0].mxu0 %v681
        %v1147 = vpop.f32.mrb[0].mxu0
        %v1148 = vadd.f32 %v446, %v1147
        %v1149 = vpop.f32.mrb[0].mxu0
        %v1150 = vadd.f32 %v450, %v1149
        %v1151 = vpop.f32.mrb[0].mxu0
        %v1152 = vadd.f32 %v446, %v1151
        %v1153 = vpop.f32.mrb[0].mxu0
        %v1154 = vadd.f32 %v450, %v1153
        %1155 = vmatprep.mubr.bf16.mxu0 %v684
        %1156 = vmatmul.mubr.bf16.gmra.mrb[0].mxu0 %v683
        %v1157 = vpop.f32.mrb[0].mxu0
        %v1158 = vadd.f32 %v446, %v1157
        %v1159 = vpop.f32.mrb[0].mxu0
        %v1160 = vadd.f32 %v450, %v1159
        %v1161 = vpop.f32.mrb[0].mxu0
        %v1162 = vadd.f32 %v446, %v1161
        %v1163 = vpop.f32.mrb[0].mxu0
        %v1164 = vadd.f32 %v450, %v1163
        %1165 = vmatprep.mubr.bf16.mxu0 %v686
        %1166 = vmatmul.mubr.bf16.gmra.mrb[0].mxu0 %v685
        %v1167 = vpop.f32.mrb[0].mxu0
        %v1168 = vadd.f32 %v446, %v1167
        %v1169 = vpop.f32.mrb[0].mxu0
        %v1170 = vadd.f32 %v450, %v1169
        %v1171 = vpop.f32.mrb[0].mxu0
        %v1172 = vadd.f32 %v446, %v1171
        %v1173 = vpop.f32.mrb[0].mxu0
        %v1174 = vadd.f32 %v450, %v1173
        %1175 = vmatprep.mubr.bf16.mxu0 %v688
        %1176 = vmatmul.mubr.bf16.gmra.mrb[0].mxu0 %v687
        %v1177 = vpop.f32.mrb[0].mxu0
        %v1178 = vadd.f32 %v446, %v1177
        %v1179 = vpop.f32.mrb[0].mxu0
        %v1180 = vadd.f32 %v450, %v1179
        %v1181 = vpop.f32.mrb[0].mxu0
        %v1182 = vadd.f32 %v446, %v1181
        %v1183 = vpop.f32.mrb[0].mxu0
        %v1184 = vadd.f32 %v450, %v1183
        %1185 = vmatprep.mubr.bf16.mxu0 %v690
        %1186 = vmatmul.mubr.bf16.gmra.mrb[0].mxu0 %v689
        %v1187 = vpop.f32.mrb[0].mxu0
        %v1188 = vadd.f32 %v446, %v1187
        %v1189 = vpop.f32.mrb[0].mxu0
        %v1190 = vadd.f32 %v450, %v1189
        %v1191 = vpop.f32.mrb[0].mxu0
        %v1192 = vadd.f32 %v446, %v1191
        %v1193 = vpop.f32.mrb[0].mxu0
        %v1194 = vadd.f32 %v450, %v1193
        %1195 = vmatprep.mubr.bf16.mxu0 %v692
        %1196 = vmatmul.mubr.bf16.gmra.mrb[0].mxu0 %v691
        %v1197 = vpop.f32.mrb[0].mxu0
        %v1198 = vadd.f32 %v446, %v1197
        %v1199 = vpop.f32.mrb[0].mxu0
        %v1200 = vadd.f32 %v450, %v1199
        %v1201 = vpop.f32.mrb[0].mxu0
        %v1202 = vadd.f32 %v446, %v1201
        %v1203 = vpop.f32.mrb[0].mxu0
        %v1204 = vadd.f32 %v450, %v1203
        %1205 = vmatprep.mubr.bf16.mxu0 %v694
        %1206 = vmatmul.mubr.bf16.gmra.mrb[0].mxu0 %v693
        %v1207 = vpop.f32.mrb[0].mxu0
        %v1208 = vadd.f32 %v446, %v1207
        %v1209 = vpop.f32.mrb[0].mxu0
        %v1210 = vadd.f32 %v450, %v1209
        %v1211 = vpop.f32.mrb[0].mxu0
        %v1212 = vadd.f32 %v446, %v1211
        %v1213 = vpop.f32.mrb[0].mxu0
        %v1214 = vadd.f32 %v450, %v1213
        %1215 = vmatprep.mubr.bf16.mxu0 %v696
        %1216 = vmatmul.mubr.bf16.gmra.mrb[0].mxu0 %v695
        %v1217 = vpop.f32.mrb[0].mxu0
        %v1218 = vadd.f32 %v446, %v1217
        %v1219 = vpop.f32.mrb[0].mxu0
        %v1220 = vadd.f32 %v450, %v1219
        %v1221 = vpop.f32.mrb[0].mxu0
        %v1222 = vadd.f32 %v446, %v1221
        %v1223 = vpop.f32.mrb[0].mxu0
        %v1224 = vadd.f32 %v450, %v1223
        %1225 = vmatprep.mubr.bf16.mxu0 %v698
        %1226 = vmatmul.mubr.bf16.gmra.mrb[0].mxu0 %v697
        %v1227 = vpop.f32.mrb[0].mxu0
        %v1228 = vadd.f32 %v446, %v1227
        %v1229 = vpop.f32.mrb[0].mxu0
        %v1230 = vadd.f32 %v450, %v1229
        %v1231 = vpop.f32.mrb[0].mxu0
        %v1232 = vadd.f32 %v446, %v1231
        %v1233 = vpop.f32.mrb[0].mxu0
        %v1234 = vadd.f32 %v450, %v1233
        %1235 = vmatprep.mubr.bf16.mxu0 %v700
        %1236 = vmatmul.mubr.bf16.gmra.mrb[0].mxu0 %v699
        %v1237 = vpop.f32.mrb[0].mxu0
        %v1238 = vadd.f32 %v446, %v1237
        %v1239 = vpop.f32.mrb[0].mxu0
        %v1240 = vadd.f32 %v450, %v1239
        %v1241 = vpop.f32.mrb[0].mxu0
        %v1242 = vadd.f32 %v446, %v1241
        %v1243 = vpop.f32.mrb[0].mxu0
        %v1244 = vadd.f32 %v450, %v1243
        %1245 = vmatprep.mubr.bf16.mxu0 %v702
        %1246 = vmatmul.mubr.bf16.gmra.mrb[0].mxu0 %v701
        %v1247 = vpop.f32.mrb[0].mxu0
        %v1248 = vadd.f32 %v446, %v1247
        %v1249 = vpop.f32.mrb[0].mxu0
        %v1250 = vadd.f32 %v450, %v1249
        %v1251 = vpop.f32.mrb[0].mxu0
        %v1252 = vadd.f32 %v446, %v1251
        %v1253 = vpop.f32.mrb[0].mxu0
        %v1254 = vadd.f32 %v450, %v1253
        %1255 = vmatprep.mubr.bf16.mxu0 %v704
        %1256 = vmatmul.mubr.bf16.gmra.mrb[0].mxu0 %v703
        %v1257 = vpop.f32.mrb[0].mxu0
        %v1258 = vadd.f32 %v446, %v1257
        %v1259 = vpop.f32.mrb[0].mxu0
        %v1260 = vadd.f32 %v450, %v1259
        %v1261 = vpop.f32.mrb[0].mxu0
        %v1262 = vadd.f32 %v446, %v1261
        %v1263 = vpop.f32.mrb[0].mxu0
        %v1264 = vadd.f32 %v450, %v1263
        %1265 = vmatprep.mubr.bf16.mxu0 %v706
        %1266 = vmatmul.mubr.bf16.gmra.mrb[0].mxu0 %v705
        %v1267 = vpop.f32.mrb[0].mxu0
        %v1268 = vadd.f32 %v446, %v1267
        %v1269 = vpop.f32.mrb[0].mxu0
        %v1270 = vadd.f32 %v450, %v1269
        %v1271 = vpop.f32.mrb[0].mxu0
        %v1272 = vadd.f32 %v446, %v1271
        %v1273 = vpop.f32.mrb[0].mxu0
        %v1274 = vadd.f32 %v450, %v1273
        %1275 = vmatprep.mubr.bf16.mxu0 %v708
        %1276 = vmatmul.mubr.bf16.gmra.mrb[0].mxu0 %v707
        %v1277 = vpop.f32.mrb[0].mxu0
        %v1278 = vadd.f32 %v446, %v1277
        %v1279 = vpop.f32.mrb[0].mxu0
        %v1280 = vadd.f32 %v450, %v1279
        %v1281 = vpop.f32.mrb[0].mxu0
        %v1282 = vadd.f32 %v446, %v1281
        %v1283 = vpop.f32.mrb[0].mxu0
        %v1284 = vadd.f32 %v450, %v1283
        %1285 = vdwg.mxu0
        %v1286 = vmax.f32 %v968, 0.0
        %v1287 = vmax.f32 %v970, 0.0
        %v1288 = vmax.f32 %v972, 0.0
        %v1289 = vmax.f32 %v974, 0.0
        %v1290 = vmax.f32 %v978, 0.0
        %v1291 = vmax.f32 %v980, 0.0
        %v1292 = vmax.f32 %v982, 0.0
        %v1293 = vmax.f32 %v984, 0.0
        %v1294 = vmax.f32 %v988, 0.0
        %v1295 = vmax.f32 %v990, 0.0
        %v1296 = vmax.f32 %v992, 0.0
        %v1297 = vmax.f32 %v994, 0.0
        %v1298 = vmax.f32 %v998, 0.0
        %v1299 = vmax.f32 %v1000, 0.0
        %v1300 = vmax.f32 %v1002, 0.0
        %v1301 = vmax.f32 %v1004, 0.0
        %v1302 = vmax.f32 %v1008, 0.0
        %v1303 = vmax.f32 %v1010, 0.0
        %v1304 = vmax.f32 %v1012, 0.0
        %v1305 = vmax.f32 %v1014, 0.0
        %v1306 = vmax.f32 %v1018, 0.0
        %v1307 = vmax.f32 %v1020, 0.0
        %v1308 = vmax.f32 %v1022, 0.0
        %v1309 = vmax.f32 %v1024, 0.0
        %v1310 = vmax.f32 %v1028, 0.0
        %v1311 = vmax.f32 %v1030, 0.0
        %v1312 = vmax.f32 %v1032, 0.0
        %v1313 = vmax.f32 %v1034, 0.0
        %v1314 = vmax.f32 %v1038, 0.0
        %v1315 = vmax.f32 %v1040, 0.0
        %v1316 = vmax.f32 %v1042, 0.0
        %v1317 = vmax.f32 %v1044, 0.0
        %v1318 = vmax.f32 %v1048, 0.0
        %v1319 = vmax.f32 %v1050, 0.0
        %v1320 = vmax.f32 %v1052, 0.0
        %v1321 = vmax.f32 %v1054, 0.0
        %v1322 = vmax.f32 %v1058, 0.0
        %v1323 = vmax.f32 %v1060, 0.0
        %v1324 = vmax.f32 %v1062, 0.0
        %v1325 = vmax.f32 %v1064, 0.0
        %v1326 = vmax.f32 %v1068, 0.0
        %v1327 = vmax.f32 %v1070, 0.0
        %v1328 = vmax.f32 %v1072, 0.0
        %v1329 = vmax.f32 %v1074, 0.0
        %v1330 = vmax.f32 %v1078, 0.0
        %v1331 = vmax.f32 %v1080, 0.0
        %v1332 = vmax.f32 %v1082, 0.0
        %v1333 = vmax.f32 %v1084, 0.0
        %v1334 = vmax.f32 %v1088, 0.0
        %v1335 = vmax.f32 %v1090, 0.0
        %v1336 = vmax.f32 %v1092, 0.0
        %v1337 = vmax.f32 %v1094, 0.0
        %v1338 = vmax.f32 %v1098, 0.0
        %v1339 = vmax.f32 %v1100, 0.0
        %v1340 = vmax.f32 %v1102, 0.0
        %v1341 = vmax.f32 %v1104, 0.0
        %v1342 = vmax.f32 %v1108, 0.0
        %v1343 = vmax.f32 %v1110, 0.0
        %v1344 = vmax.f32 %v1112, 0.0
        %v1345 = vmax.f32 %v1114, 0.0
        %v1346 = vmax.f32 %v1118, 0.0
        %v1347 = vmax.f32 %v1120, 0.0
        %v1348 = vmax.f32 %v1122, 0.0
        %v1349 = vmax.f32 %v1124, 0.0
        %v1350 = vmax.f32 %v1128, 0.0
        %v1351 = vmax.f32 %v1130, 0.0
        %v1352 = vmax.f32 %v1132, 0.0
        %v1353 = vmax.f32 %v1134, 0.0
        %v1354 = vmax.f32 %v1138, 0.0
        %v1355 = vmax.f32 %v1140, 0.0
        %v1356 = vmax.f32 %v1142, 0.0
        %v1357 = vmax.f32 %v1144, 0.0
        %v1358 = vmax.f32 %v1148, 0.0
        %v1359 = vmax.f32 %v1150, 0.0
        %v1360 = vmax.f32 %v1152, 0.0
        %v1361 = vmax.f32 %v1154, 0.0
        %v1362 = vmax.f32 %v1158, 0.0
        %v1363 = vmax.f32 %v1160, 0.0
        %v1364 = vmax.f32 %v1162, 0.0
        %v1365 = vmax.f32 %v1164, 0.0
        %v1366 = vmax.f32 %v1168, 0.0
        %v1367 = vmax.f32 %v1170, 0.0
        %v1368 = vmax.f32 %v1172, 0.0
        %v1369 = vmax.f32 %v1174, 0.0
        %v1370 = vmax.f32 %v1178, 0.0
        %v1371 = vmax.f32 %v1180, 0.0
        %v1372 = vmax.f32 %v1182, 0.0
        %v1373 = vmax.f32 %v1184, 0.0
        %v1374 = vmax.f32 %v1188, 0.0
        %v1375 = vmax.f32 %v1190, 0.0
        %v1376 = vmax.f32 %v1192, 0.0
        %v1377 = vmax.f32 %v1194, 0.0
        %v1378 = vmax.f32 %v1198, 0.0
        %v1379 = vmax.f32 %v1200, 0.0
        %v1380 = vmax.f32 %v1202, 0.0
        %v1381 = vmax.f32 %v1204, 0.0
        %v1382 = vmax.f32 %v1208, 0.0
        %v1383 = vmax.f32 %v1210, 0.0
        %v1384 = vmax.f32 %v1212, 0.0
        %v1385 = vmax.f32 %v1214, 0.0
        %v1386 = vmax.f32 %v1218, 0.0
        %v1387 = vmax.f32 %v1220, 0.0
        %v1388 = vmax.f32 %v1222, 0.0
        %v1389 = vmax.f32 %v1224, 0.0
        %v1390 = vmax.f32 %v1228, 0.0
        %v1391 = vmax.f32 %v1230, 0.0
        %v1392 = vmax.f32 %v1232, 0.0
        %v1393 = vmax.f32 %v1234, 0.0
        %v1394 = vmax.f32 %v1238, 0.0
        %v1395 = vmax.f32 %v1240, 0.0
        %v1396 = vmax.f32 %v1242, 0.0
        %v1397 = vmax.f32 %v1244, 0.0
        %v1398 = vmax.f32 %v1248, 0.0
        %v1399 = vmax.f32 %v1250, 0.0
        %v1400 = vmax.f32 %v1252, 0.0
        %v1401 = vmax.f32 %v1254, 0.0
        %v1402 = vmax.f32 %v1258, 0.0
        %v1403 = vmax.f32 %v1260, 0.0
        %v1404 = vmax.f32 %v1262, 0.0
        %v1405 = vmax.f32 %v1264, 0.0
        %v1406 = vmax.f32 %v1268, 0.0
        %v1407 = vmax.f32 %v1270, 0.0
        %v1408 = vmax.f32 %v1272, 0.0
        %v1409 = vmax.f32 %v1274, 0.0
        %v1410 = vmax.f32 %v1278, 0.0
        %v1411 = vmax.f32 %v1280, 0.0
        %v1412 = vmax.f32 %v1282, 0.0
        %v1413 = vmax.f32 %v1284, 0.0
        %v1414 = vpack.c.bf16 %v1288, %v1286
        %v1415 = vpack.c.bf16 %v1289, %v1287
        %v1416 = vpack.c.bf16 %v1292, %v1290
        %v1417 = vpack.c.bf16 %v1293, %v1291
        %v1418 = vpack.c.bf16 %v1296, %v1294
        %v1419 = vpack.c.bf16 %v1297, %v1295
        %v1420 = vpack.c.bf16 %v1300, %v1298
        %v1421 = vpack.c.bf16 %v1301, %v1299
        %v1422 = vpack.c.bf16 %v1304, %v1302
        %v1423 = vpack.c.bf16 %v1305, %v1303
        %v1424 = vpack.c.bf16 %v1308, %v1306
        %v1425 = vpack.c.bf16 %v1309, %v1307
        %v1426 = vpack.c.bf16 %v1312, %v1310
        %v1427 = vpack.c.bf16 %v1313, %v1311
        %v1428 = vpack.c.bf16 %v1316, %v1314
        %v1429 = vpack.c.bf16 %v1317, %v1315
        %v1430 = vpack.c.bf16 %v1320, %v1318
        %v1431 = vpack.c.bf16 %v1321, %v1319
        %v1432 = vpack.c.bf16 %v1324, %v1322
        %v1433 = vpack.c.bf16 %v1325, %v1323
        %v1434 = vpack.c.bf16 %v1328, %v1326
        %v1435 = vpack.c.bf16 %v1329, %v1327
        %v1436 = vpack.c.bf16 %v1332, %v1330
        %v1437 = vpack.c.bf16 %v1333, %v1331
        %v1438 = vpack.c.bf16 %v1336, %v1334
        %v1439 = vpack.c.bf16 %v1337, %v1335
        %v1440 = vpack.c.bf16 %v1340, %v1338
        %v1441 = vpack.c.bf16 %v1341, %v1339
        %v1442 = vpack.c.bf16 %v1344, %v1342
        %v1443 = vpack.c.bf16 %v1345, %v1343
        %v1444 = vpack.c.bf16 %v1348, %v1346
        %v1445 = vpack.c.bf16 %v1349, %v1347
        %v1446 = vpack.c.bf16 %v1352, %v1350
        %v1447 = vpack.c.bf16 %v1353, %v1351
        %v1448 = vpack.c.bf16 %v1356, %v1354
        %v1449 = vpack.c.bf16 %v1357, %v1355
        %v1450 = vpack.c.bf16 %v1360, %v1358
        %v1451 = vpack.c.bf16 %v1361, %v1359
        %v1452 = vpack.c.bf16 %v1364, %v1362
        %v1453 = vpack.c.bf16 %v1365, %v1363
        %v1454 = vpack.c.bf16 %v1368, %v1366
        %v1455 = vpack.c.bf16 %v1369, %v1367
        %v1456 = vpack.c.bf16 %v1372, %v1370
        %v1457 = vpack.c.bf16 %v1373, %v1371
        %v1458 = vpack.c.bf16 %v1376, %v1374
        %v1459 = vpack.c.bf16 %v1377, %v1375
        %v1460 = vpack.c.bf16 %v1380, %v1378
        %v1461 = vpack.c.bf16 %v1381, %v1379
        %v1462 = vpack.c.bf16 %v1384, %v1382
        %v1463 = vpack.c.bf16 %v1385, %v1383
        %v1464 = vpack.c.bf16 %v1388, %v1386
        %v1465 = vpack.c.bf16 %v1389, %v1387
        %v1466 = vpack.c.bf16 %v1392, %v1390
        %v1467 = vpack.c.bf16 %v1393, %v1391
        %v1468 = vpack.c.bf16 %v1396, %v1394
        %v1469 = vpack.c.bf16 %v1397, %v1395
        %v1470 = vpack.c.bf16 %v1400, %v1398
        %v1471 = vpack.c.bf16 %v1401, %v1399
        %v1472 = vpack.c.bf16 %v1404, %v1402
        %v1473 = vpack.c.bf16 %v1405, %v1403
        %v1474 = vpack.c.bf16 %v1408, %v1406
        %v1475 = vpack.c.bf16 %v1409, %v1407
        %v1476 = vpack.c.bf16 %v1412, %v1410
        %v1477 = vpack.c.bf16 %v1413, %v1411
        %v1478 = vld [vmem:[#allocation7] sm:$0xff]
        %v1479 = vld [vmem:[#allocation7 + $0x8] sm:$0xff]
        %v1480 = vld [vmem:[#allocation7 + $0x10] sm:$0xff]
        %v1481 = vld [vmem:[#allocation7 + $0x18] sm:$0xff]
        %v1482 = vld [vmem:[#allocation7 + $0x20] sm:$0xff]
        %v1483 = vld [vmem:[#allocation7 + $0x28] sm:$0xff]
        %v1484 = vld [vmem:[#allocation7 + $0x30] sm:$0xff]
        %v1485 = vld [vmem:[#allocation7 + $0x38] sm:$0xff]
        %v1486 = vld [vmem:[#allocation7 + $0x40] sm:$0xff]
        %v1487 = vld [vmem:[#allocation7 + $0x48] sm:$0xff]
        %v1488 = vld [vmem:[#allocation7 + $0x50] sm:$0xff]
        %v1489 = vld [vmem:[#allocation7 + $0x58] sm:$0xff]
        %v1490 = vld [vmem:[#allocation7 + $0x60] sm:$0xff]
        %v1491 = vld [vmem:[#allocation7 + $0x68] sm:$0xff]
        %v1492 = vld [vmem:[#allocation7 + $0x70] sm:$0xff]
        %v1493 = vld [vmem:[#allocation7 + $0x78] sm:$0xff]
        %v1494 = vld [vmem:[#allocation7 + $0x80] sm:$0xff]
        %v1495 = vld [vmem:[#allocation7 + $0x88] sm:$0xff]
        %v1496 = vld [vmem:[#allocation7 + $0x90] sm:$0xff]
        %v1497 = vld [vmem:[#allocation7 + $0x98] sm:$0xff]
        %v1498 = vld [vmem:[#allocation7 + $0xa0] sm:$0xff]
        %v1499 = vld [vmem:[#allocation7 + $0xa8] sm:$0xff]
        %v1500 = vld [vmem:[#allocation7 + $0xb0] sm:$0xff]
        %v1501 = vld [vmem:[#allocation7 + $0xb8] sm:$0xff]
        %v1502 = vld [vmem:[#allocation7 + $0xc0] sm:$0xff]
        %v1503 = vld [vmem:[#allocation7 + $0xc8] sm:$0xff]
        %v1504 = vld [vmem:[#allocation7 + $0xd0] sm:$0xff]
        %v1505 = vld [vmem:[#allocation7 + $0xd8] sm:$0xff]
        %v1506 = vld [vmem:[#allocation7 + $0xe0] sm:$0xff]
        %v1507 = vld [vmem:[#allocation7 + $0xe8] sm:$0xff]
        %v1508 = vld [vmem:[#allocation7 + $0xf0] sm:$0xff]
        %v1509 = vld [vmem:[#allocation7 + $0xf8] sm:$0xff]
        %v1510 = vld [vmem:[%s4] sm:$0x3]
        %v1512 = vlaneseq
        %v1513 = vshrl.u32 %v1512, 7
        %v1514 = vsub.s32 0, %v1513
        %v1515 = vrot.slane %v1510, %v1514
        %v1516 = vlaneseq
        %v1517 = vshrl.u32 %v1516, 7
        %v1518 = vsub.s32 1, %v1517
        %v1519 = vrot.slane %v1510, %v1518
        %v1554 = vunpack.c.l.b16 %v1478
        %v1555 = vunpack.c.h.b16 %v1478
        %v1556 = vunpack.c.l.b16 %v1479
        %v1557 = vunpack.c.h.b16 %v1479
        %v1558 = vunpack.c.l.b16 %v1480
        %v1559 = vunpack.c.h.b16 %v1480
        %v1560 = vunpack.c.l.b16 %v1481
        %v1561 = vunpack.c.h.b16 %v1481
        %v1562 = vunpack.c.l.b16 %v1482
        %v1563 = vunpack.c.h.b16 %v1482
        %v1564 = vunpack.c.l.b16 %v1483
        %v1565 = vunpack.c.h.b16 %v1483
        %v1566 = vunpack.c.l.b16 %v1484
        %v1567 = vunpack.c.h.b16 %v1484
        %v1568 = vunpack.c.l.b16 %v1485
        %v1569 = vunpack.c.h.b16 %v1485
        %v1570 = vunpack.c.l.b16 %v1486
        %v1571 = vunpack.c.h.b16 %v1486
        %v1572 = vunpack.c.l.b16 %v1487
        %v1573 = vunpack.c.h.b16 %v1487
        %v1574 = vunpack.c.l.b16 %v1488
        %v1575 = vunpack.c.h.b16 %v1488
        %v1576 = vunpack.c.l.b16 %v1489
        %v1577 = vunpack.c.h.b16 %v1489
        %v1578 = vunpack.c.l.b16 %v1490
        %v1579 = vunpack.c.h.b16 %v1490
        %v1580 = vunpack.c.l.b16 %v1491
        %v1581 = vunpack.c.h.b16 %v1491
        %v1582 = vunpack.c.l.b16 %v1492
        %v1583 = vunpack.c.h.b16 %v1492
        %v1584 = vunpack.c.l.b16 %v1493
        %v1585 = vunpack.c.h.b16 %v1493
        %v1586 = vunpack.c.l.b16 %v1494
        %v1587 = vunpack.c.h.b16 %v1494
        %v1588 = vunpack.c.l.b16 %v1495
        %v1589 = vunpack.c.h.b16 %v1495
        %v1590 = vunpack.c.l.b16 %v1496
        %v1591 = vunpack.c.h.b16 %v1496
        %v1592 = vunpack.c.l.b16 %v1497
        %v1593 = vunpack.c.h.b16 %v1497
        %v1594 = vunpack.c.l.b16 %v1498
        %v1595 = vunpack.c.h.b16 %v1498
        %v1596 = vunpack.c.l.b16 %v1499
        %v1597 = vunpack.c.h.b16 %v1499
        %v1598 = vunpack.c.l.b16 %v1500
        %v1599 = vunpack.c.h.b16 %v1500
        %v1600 = vunpack.c.l.b16 %v1501
        %v1601 = vunpack.c.h.b16 %v1501
        %v1602 = vunpack.c.l.b16 %v1502
        %v1603 = vunpack.c.h.b16 %v1502
        %v1604 = vunpack.c.l.b16 %v1503
        %v1605 = vunpack.c.h.b16 %v1503
        %v1606 = vunpack.c.l.b16 %v1504
        %v1607 = vunpack.c.h.b16 %v1504
        %v1608 = vunpack.c.l.b16 %v1505
        %v1609 = vunpack.c.h.b16 %v1505
        %v1610 = vunpack.c.l.b16 %v1506
        %v1611 = vunpack.c.h.b16 %v1506
        %v1612 = vunpack.c.l.b16 %v1507
        %v1613 = vunpack.c.h.b16 %v1507
        %v1614 = vunpack.c.l.b16 %v1508
        %v1615 = vunpack.c.h.b16 %v1508
        %v1616 = vunpack.c.l.b16 %v1509
        %v1617 = vunpack.c.h.b16 %v1509
        %v1618 = vpack.c.b16 %v1556, %v1554
        %v1619 = vpack.c.b16 %v1557, %v1555
        %v1620 = vpack.c.b16 %v1560, %v1558
        %v1621 = vpack.c.b16 %v1561, %v1559
        %v1622 = vpack.c.b16 %v1564, %v1562
        %v1623 = vpack.c.b16 %v1565, %v1563
        %v1624 = vpack.c.b16 %v1568, %v1566
        %v1625 = vpack.c.b16 %v1569, %v1567
        %v1626 = vpack.c.b16 %v1572, %v1570
        %v1627 = vpack.c.b16 %v1573, %v1571
        %v1628 = vpack.c.b16 %v1576, %v1574
        %v1629 = vpack.c.b16 %v1577, %v1575
        %v1630 = vpack.c.b16 %v1580, %v1578
        %v1631 = vpack.c.b16 %v1581, %v1579
        %v1632 = vpack.c.b16 %v1584, %v1582
        %v1633 = vpack.c.b16 %v1585, %v1583
        %v1634 = vpack.c.b16 %v1588, %v1586
        %v1635 = vpack.c.b16 %v1589, %v1587
        %v1636 = vpack.c.b16 %v1592, %v1590
        %v1637 = vpack.c.b16 %v1593, %v1591
        %v1638 = vpack.c.b16 %v1596, %v1594
        %v1639 = vpack.c.b16 %v1597, %v1595
        %v1640 = vpack.c.b16 %v1600, %v1598
        %v1641 = vpack.c.b16 %v1601, %v1599
        %v1642 = vpack.c.b16 %v1604, %v1602
        %v1643 = vpack.c.b16 %v1605, %v1603
        %v1644 = vpack.c.b16 %v1608, %v1606
        %v1645 = vpack.c.b16 %v1609, %v1607
        %v1646 = vpack.c.b16 %v1612, %v1610
        %v1647 = vpack.c.b16 %v1613, %v1611
        %v1648 = vpack.c.b16 %v1616, %v1614
        %v1649 = vpack.c.b16 %v1617, %v1615
        %1682 = vmatprep.subr.bf16.mxu0 %v1619
        %1683 = vmatpush1.bf16.msra.mxu0 %v1618
        %1684 = vmatprep.subr.bf16.mxu0 %v1621
        %1685 = vmatpush1.bf16.msra.mxu0 %v1620
        %1686 = vmatprep.subr.bf16.mxu0 %v1623
        %1687 = vmatpush1.bf16.msra.mxu0 %v1622
        %1688 = vmatprep.subr.bf16.mxu0 %v1625
        %1689 = vmatpush1.bf16.msra.mxu0 %v1624
        %1690 = vmatprep.subr.bf16.mxu0 %v1627
        %1691 = vmatpush1.bf16.msra.mxu0 %v1626
        %1692 = vmatprep.subr.bf16.mxu0 %v1629
        %1693 = vmatpush1.bf16.msra.mxu0 %v1628
        %1694 = vmatprep.subr.bf16.mxu0 %v1631
        %1695 = vmatpush1.bf16.msra.mxu0 %v1630
        %1696 = vmatprep.subr.bf16.mxu0 %v1633
        %1697 = vmatpush1.bf16.msra.mxu0 %v1632
        %1698 = vmatprep.subr.bf16.mxu0 %v1635
        %1699 = vmatpush1.bf16.msra.mxu0 %v1634
        %1700 = vmatprep.subr.bf16.mxu0 %v1637
        %1701 = vmatpush1.bf16.msra.mxu0 %v1636
        %1702 = vmatprep.subr.bf16.mxu0 %v1639
        %1703 = vmatpush1.bf16.msra.mxu0 %v1638
        %1704 = vmatprep.subr.bf16.mxu0 %v1641
        %1705 = vmatpush1.bf16.msra.mxu0 %v1640
        %1706 = vmatprep.subr.bf16.mxu0 %v1643
        %1707 = vmatpush1.bf16.msra.mxu0 %v1642
        %1708 = vmatprep.subr.bf16.mxu0 %v1645
        %1709 = vmatpush1.bf16.msra.mxu0 %v1644
        %1710 = vmatprep.subr.bf16.mxu0 %v1647
        %1711 = vmatpush1.bf16.msra.mxu0 %v1646
        %1712 = vmatprep.subr.bf16.mxu0 %v1649
        %1713 = vmatpush1.bf16.msra.mxu0 %v1648
        %1714 = vmatprep.mubr.bf16.mxu0 %v1415
        %1715 = vmatmul.mubr.bf16.gmra.mrb[0].mxu0 %v1414
        %v1716 = vpop.f32.mrb[0].mxu0
        %v1717 = vadd.f32 %v1515, %v1716
        %v1718 = vpop.f32.mrb[0].mxu0
        %v1719 = vadd.f32 %v1519, %v1718
        %v1720 = vpop.f32.mrb[0].mxu0
        %v1721 = vadd.f32 %v1515, %v1720
        %v1722 = vpop.f32.mrb[0].mxu0
        %v1723 = vadd.f32 %v1519, %v1722
        %1724 = vmatprep.mubr.bf16.mxu0 %v1417
        %1725 = vmatmul.mubr.bf16.gmra.mrb[0].mxu0 %v1416
        %v1726 = vpop.f32.mrb[0].mxu0
        %v1727 = vadd.f32 %v1515, %v1726
        %v1728 = vpop.f32.mrb[0].mxu0
        %v1729 = vadd.f32 %v1519, %v1728
        %v1730 = vpop.f32.mrb[0].mxu0
        %v1731 = vadd.f32 %v1515, %v1730
        %v1732 = vpop.f32.mrb[0].mxu0
        %v1733 = vadd.f32 %v1519, %v1732
        %1734 = vmatprep.mubr.bf16.mxu0 %v1419
        %1735 = vmatmul.mubr.bf16.gmra.mrb[0].mxu0 %v1418
        %v1736 = vpop.f32.mrb[0].mxu0
        %v1737 = vadd.f32 %v1515, %v1736
        %v1738 = vpop.f32.mrb[0].mxu0
        %v1739 = vadd.f32 %v1519, %v1738
        %v1740 = vpop.f32.mrb[0].mxu0
        %v1741 = vadd.f32 %v1515, %v1740
        %v1742 = vpop.f32.mrb[0].mxu0
        %v1743 = vadd.f32 %v1519, %v1742
        %1744 = vmatprep.mubr.bf16.mxu0 %v1421
        %1745 = vmatmul.mubr.bf16.gmra.mrb[0].mxu0 %v1420
        %v1746 = vpop.f32.mrb[0].mxu0
        %v1747 = vadd.f32 %v1515, %v1746
        %v1748 = vpop.f32.mrb[0].mxu0
        %v1749 = vadd.f32 %v1519, %v1748
        %v1750 = vpop.f32.mrb[0].mxu0
        %v1751 = vadd.f32 %v1515, %v1750
        %v1752 = vpop.f32.mrb[0].mxu0
        %v1753 = vadd.f32 %v1519, %v1752
        %1754 = vmatprep.mubr.bf16.mxu0 %v1423
        %1755 = vmatmul.mubr.bf16.gmra.mrb[0].mxu0 %v1422
        %v1756 = vpop.f32.mrb[0].mxu0
        %v1757 = vadd.f32 %v1515, %v1756
        %v1758 = vpop.f32.mrb[0].mxu0
        %v1759 = vadd.f32 %v1519, %v1758
        %v1760 = vpop.f32.mrb[0].mxu0
        %v1761 = vadd.f32 %v1515, %v1760
        %v1762 = vpop.f32.mrb[0].mxu0
        %v1763 = vadd.f32 %v1519, %v1762
        %1764 = vmatprep.mubr.bf16.mxu0 %v1425
        %1765 = vmatmul.mubr.bf16.gmra.mrb[0].mxu0 %v1424
        %v1766 = vpop.f32.mrb[0].mxu0
        %v1767 = vadd.f32 %v1515, %v1766
        %v1768 = vpop.f32.mrb[0].mxu0
        %v1769 = vadd.f32 %v1519, %v1768
        %v1770 = vpop.f32.mrb[0].mxu0
        %v1771 = vadd.f32 %v1515, %v1770
        %v1772 = vpop.f32.mrb[0].mxu0
        %v1773 = vadd.f32 %v1519, %v1772
        %1774 = vmatprep.mubr.bf16.mxu0 %v1427
        %1775 = vmatmul.mubr.bf16.gmra.mrb[0].mxu0 %v1426
        %v1776 = vpop.f32.mrb[0].mxu0
        %v1777 = vadd.f32 %v1515, %v1776
        %v1778 = vpop.f32.mrb[0].mxu0
        %v1779 = vadd.f32 %v1519, %v1778
        %v1780 = vpop.f32.mrb[0].mxu0
        %v1781 = vadd.f32 %v1515, %v1780
        %v1782 = vpop.f32.mrb[0].mxu0
        %v1783 = vadd.f32 %v1519, %v1782
        %1784 = vmatprep.mubr.bf16.mxu0 %v1429
        %1785 = vmatmul.mubr.bf16.gmra.mrb[0].mxu0 %v1428
        %v1786 = vpop.f32.mrb[0].mxu0
        %v1787 = vadd.f32 %v1515, %v1786
        %v1788 = vpop.f32.mrb[0].mxu0
        %v1789 = vadd.f32 %v1519, %v1788
        %v1790 = vpop.f32.mrb[0].mxu0
        %v1791 = vadd.f32 %v1515, %v1790
        %v1792 = vpop.f32.mrb[0].mxu0
        %v1793 = vadd.f32 %v1519, %v1792
        %1794 = vmatprep.mubr.bf16.mxu0 %v1431
        %1795 = vmatmul.mubr.bf16.gmra.mrb[0].mxu0 %v1430
        %v1796 = vpop.f32.mrb[0].mxu0
        %v1797 = vadd.f32 %v1515, %v1796
        %v1798 = vpop.f32.mrb[0].mxu0
        %v1799 = vadd.f32 %v1519, %v1798
        %v1800 = vpop.f32.mrb[0].mxu0
        %v1801 = vadd.f32 %v1515, %v1800
        %v1802 = vpop.f32.mrb[0].mxu0
        %v1803 = vadd.f32 %v1519, %v1802
        %1804 = vmatprep.mubr.bf16.mxu0 %v1433
        %1805 = vmatmul.mubr.bf16.gmra.mrb[0].mxu0 %v1432
        %v1806 = vpop.f32.mrb[0].mxu0
        %v1807 = vadd.f32 %v1515, %v1806
        %v1808 = vpop.f32.mrb[0].mxu0
        %v1809 = vadd.f32 %v1519, %v1808
        %v1810 = vpop.f32.mrb[0].mxu0
        %v1811 = vadd.f32 %v1515, %v1810
        %v1812 = vpop.f32.mrb[0].mxu0
        %v1813 = vadd.f32 %v1519, %v1812
        %1814 = vmatprep.mubr.bf16.mxu0 %v1435
        %1815 = vmatmul.mubr.bf16.gmra.mrb[0].mxu0 %v1434
        %v1816 = vpop.f32.mrb[0].mxu0
        %v1817 = vadd.f32 %v1515, %v1816
        %v1818 = vpop.f32.mrb[0].mxu0
        %v1819 = vadd.f32 %v1519, %v1818
        %v1820 = vpop.f32.mrb[0].mxu0
        %v1821 = vadd.f32 %v1515, %v1820
        %v1822 = vpop.f32.mrb[0].mxu0
        %v1823 = vadd.f32 %v1519, %v1822
        %1824 = vmatprep.mubr.bf16.mxu0 %v1437
        %1825 = vmatmul.mubr.bf16.gmra.mrb[0].mxu0 %v1436
        %v1826 = vpop.f32.mrb[0].mxu0
        %v1827 = vadd.f32 %v1515, %v1826
        %v1828 = vpop.f32.mrb[0].mxu0
        %v1829 = vadd.f32 %v1519, %v1828
        %v1830 = vpop.f32.mrb[0].mxu0
        %v1831 = vadd.f32 %v1515, %v1830
        %v1832 = vpop.f32.mrb[0].mxu0
        %v1833 = vadd.f32 %v1519, %v1832
        %1834 = vmatprep.mubr.bf16.mxu0 %v1439
        %1835 = vmatmul.mubr.bf16.gmra.mrb[0].mxu0 %v1438
        %v1836 = vpop.f32.mrb[0].mxu0
        %v1837 = vadd.f32 %v1515, %v1836
        %v1838 = vpop.f32.mrb[0].mxu0
        %v1839 = vadd.f32 %v1519, %v1838
        %v1840 = vpop.f32.mrb[0].mxu0
        %v1841 = vadd.f32 %v1515, %v1840
        %v1842 = vpop.f32.mrb[0].mxu0
        %v1843 = vadd.f32 %v1519, %v1842
        %1844 = vmatprep.mubr.bf16.mxu0 %v1441
        %1845 = vmatmul.mubr.bf16.gmra.mrb[0].mxu0 %v1440
        %v1846 = vpop.f32.mrb[0].mxu0
        %v1847 = vadd.f32 %v1515, %v1846
        %v1848 = vpop.f32.mrb[0].mxu0
        %v1849 = vadd.f32 %v1519, %v1848
        %v1850 = vpop.f32.mrb[0].mxu0
        %v1851 = vadd.f32 %v1515, %v1850
        %v1852 = vpop.f32.mrb[0].mxu0
        %v1853 = vadd.f32 %v1519, %v1852
        %1854 = vmatprep.mubr.bf16.mxu0 %v1443
        %1855 = vmatmul.mubr.bf16.gmra.mrb[0].mxu0 %v1442
        %v1856 = vpop.f32.mrb[0].mxu0
        %v1857 = vadd.f32 %v1515, %v1856
        %v1858 = vpop.f32.mrb[0].mxu0
        %v1859 = vadd.f32 %v1519, %v1858
        %v1860 = vpop.f32.mrb[0].mxu0
        %v1861 = vadd.f32 %v1515, %v1860
        %v1862 = vpop.f32.mrb[0].mxu0
        %v1863 = vadd.f32 %v1519, %v1862
        %1864 = vmatprep.mubr.bf16.mxu0 %v1445
        %1865 = vmatmul.mubr.bf16.gmra.mrb[0].mxu0 %v1444
        %v1866 = vpop.f32.mrb[0].mxu0
        %v1867 = vadd.f32 %v1515, %v1866
        %v1868 = vpop.f32.mrb[0].mxu0
        %v1869 = vadd.f32 %v1519, %v1868
        %v1870 = vpop.f32.mrb[0].mxu0
        %v1871 = vadd.f32 %v1515, %v1870
        %v1872 = vpop.f32.mrb[0].mxu0
        %v1873 = vadd.f32 %v1519, %v1872
        %1874 = vmatprep.mubr.bf16.mxu0 %v1447
        %1875 = vmatmul.mubr.bf16.gmra.mrb[0].mxu0 %v1446
        %v1876 = vpop.f32.mrb[0].mxu0
        %v1877 = vadd.f32 %v1515, %v1876
        %v1878 = vpop.f32.mrb[0].mxu0
        %v1879 = vadd.f32 %v1519, %v1878
        %v1880 = vpop.f32.mrb[0].mxu0
        %v1881 = vadd.f32 %v1515, %v1880
        %v1882 = vpop.f32.mrb[0].mxu0
        %v1883 = vadd.f32 %v1519, %v1882
        %1884 = vmatprep.mubr.bf16.mxu0 %v1449
        %1885 = vmatmul.mubr.bf16.gmra.mrb[0].mxu0 %v1448
        %v1886 = vpop.f32.mrb[0].mxu0
        %v1887 = vadd.f32 %v1515, %v1886
        %v1888 = vpop.f32.mrb[0].mxu0
        %v1889 = vadd.f32 %v1519, %v1888
        %v1890 = vpop.f32.mrb[0].mxu0
        %v1891 = vadd.f32 %v1515, %v1890
        %v1892 = vpop.f32.mrb[0].mxu0
        %v1893 = vadd.f32 %v1519, %v1892
        %1894 = vmatprep.mubr.bf16.mxu0 %v1451
        %1895 = vmatmul.mubr.bf16.gmra.mrb[0].mxu0 %v1450
        %v1896 = vpop.f32.mrb[0].mxu0
        %v1897 = vadd.f32 %v1515, %v1896
        %v1898 = vpop.f32.mrb[0].mxu0
        %v1899 = vadd.f32 %v1519, %v1898
        %v1900 = vpop.f32.mrb[0].mxu0
        %v1901 = vadd.f32 %v1515, %v1900
        %v1902 = vpop.f32.mrb[0].mxu0
        %v1903 = vadd.f32 %v1519, %v1902
        %1904 = vmatprep.mubr.bf16.mxu0 %v1453
        %1905 = vmatmul.mubr.bf16.gmra.mrb[0].mxu0 %v1452
        %v1906 = vpop.f32.mrb[0].mxu0
        %v1907 = vadd.f32 %v1515, %v1906
        %v1908 = vpop.f32.mrb[0].mxu0
        %v1909 = vadd.f32 %v1519, %v1908
        %v1910 = vpop.f32.mrb[0].mxu0
        %v1911 = vadd.f32 %v1515, %v1910
        %v1912 = vpop.f32.mrb[0].mxu0
        %v1913 = vadd.f32 %v1519, %v1912
        %1914 = vmatprep.mubr.bf16.mxu0 %v1455
        %1915 = vmatmul.mubr.bf16.gmra.mrb[0].mxu0 %v1454
        %v1916 = vpop.f32.mrb[0].mxu0
        %v1917 = vadd.f32 %v1515, %v1916
        %v1918 = vpop.f32.mrb[0].mxu0
        %v1919 = vadd.f32 %v1519, %v1918
        %v1920 = vpop.f32.mrb[0].mxu0
        %v1921 = vadd.f32 %v1515, %v1920
        %v1922 = vpop.f32.mrb[0].mxu0
        %v1923 = vadd.f32 %v1519, %v1922
        %1924 = vmatprep.mubr.bf16.mxu0 %v1457
        %1925 = vmatmul.mubr.bf16.gmra.mrb[0].mxu0 %v1456
        %v1926 = vpop.f32.mrb[0].mxu0
        %v1927 = vadd.f32 %v1515, %v1926
        %v1928 = vpop.f32.mrb[0].mxu0
        %v1929 = vadd.f32 %v1519, %v1928
        %v1930 = vpop.f32.mrb[0].mxu0
        %v1931 = vadd.f32 %v1515, %v1930
        %v1932 = vpop.f32.mrb[0].mxu0
        %v1933 = vadd.f32 %v1519, %v1932
        %1934 = vmatprep.mubr.bf16.mxu0 %v1459
        %1935 = vmatmul.mubr.bf16.gmra.mrb[0].mxu0 %v1458
        %v1936 = vpop.f32.mrb[0].mxu0
        %v1937 = vadd.f32 %v1515, %v1936
        %v1938 = vpop.f32.mrb[0].mxu0
        %v1939 = vadd.f32 %v1519, %v1938
        %v1940 = vpop.f32.mrb[0].mxu0
        %v1941 = vadd.f32 %v1515, %v1940
        %v1942 = vpop.f32.mrb[0].mxu0
        %v1943 = vadd.f32 %v1519, %v1942
        %1944 = vmatprep.mubr.bf16.mxu0 %v1461
        %1945 = vmatmul.mubr.bf16.gmra.mrb[0].mxu0 %v1460
        %v1946 = vpop.f32.mrb[0].mxu0
        %v1947 = vadd.f32 %v1515, %v1946
        %v1948 = vpop.f32.mrb[0].mxu0
        %v1949 = vadd.f32 %v1519, %v1948
        %v1950 = vpop.f32.mrb[0].mxu0
        %v1951 = vadd.f32 %v1515, %v1950
        %v1952 = vpop.f32.mrb[0].mxu0
        %v1953 = vadd.f32 %v1519, %v1952
        %1954 = vmatprep.mubr.bf16.mxu0 %v1463
        %1955 = vmatmul.mubr.bf16.gmra.mrb[0].mxu0 %v1462
        %v1956 = vpop.f32.mrb[0].mxu0
        %v1957 = vadd.f32 %v1515, %v1956
        %v1958 = vpop.f32.mrb[0].mxu0
        %v1959 = vadd.f32 %v1519, %v1958
        %v1960 = vpop.f32.mrb[0].mxu0
        %v1961 = vadd.f32 %v1515, %v1960
        %v1962 = vpop.f32.mrb[0].mxu0
        %v1963 = vadd.f32 %v1519, %v1962
        %1964 = vmatprep.mubr.bf16.mxu0 %v1465
        %1965 = vmatmul.mubr.bf16.gmra.mrb[0].mxu0 %v1464
        %v1966 = vpop.f32.mrb[0].mxu0
        %v1967 = vadd.f32 %v1515, %v1966
        %v1968 = vpop.f32.mrb[0].mxu0
        %v1969 = vadd.f32 %v1519, %v1968
        %v1970 = vpop.f32.mrb[0].mxu0
        %v1971 = vadd.f32 %v1515, %v1970
        %v1972 = vpop.f32.mrb[0].mxu0
        %v1973 = vadd.f32 %v1519, %v1972
        %1974 = vmatprep.mubr.bf16.mxu0 %v1467
        %1975 = vmatmul.mubr.bf16.gmra.mrb[0].mxu0 %v1466
        %v1976 = vpop.f32.mrb[0].mxu0
        %v1977 = vadd.f32 %v1515, %v1976
        %v1978 = vpop.f32.mrb[0].mxu0
        %v1979 = vadd.f32 %v1519, %v1978
        %v1980 = vpop.f32.mrb[0].mxu0
        %v1981 = vadd.f32 %v1515, %v1980
        %v1982 = vpop.f32.mrb[0].mxu0
        %v1983 = vadd.f32 %v1519, %v1982
        %1984 = vmatprep.mubr.bf16.mxu0 %v1469
        %1985 = vmatmul.mubr.bf16.gmra.mrb[0].mxu0 %v1468
        %v1986 = vpop.f32.mrb[0].mxu0
        %v1987 = vadd.f32 %v1515, %v1986
        %v1988 = vpop.f32.mrb[0].mxu0
        %v1989 = vadd.f32 %v1519, %v1988
        %v1990 = vpop.f32.mrb[0].mxu0
        %v1991 = vadd.f32 %v1515, %v1990
        %v1992 = vpop.f32.mrb[0].mxu0
        %v1993 = vadd.f32 %v1519, %v1992
        %1994 = vmatprep.mubr.bf16.mxu0 %v1471
        %1995 = vmatmul.mubr.bf16.gmra.mrb[0].mxu0 %v1470
        %v1996 = vpop.f32.mrb[0].mxu0
        %v1997 = vadd.f32 %v1515, %v1996
        %v1998 = vpop.f32.mrb[0].mxu0
        %v1999 = vadd.f32 %v1519, %v1998
        %v2000 = vpop.f32.mrb[0].mxu0
        %v2001 = vadd.f32 %v1515, %v2000
        %v2002 = vpop.f32.mrb[0].mxu0
        %v2003 = vadd.f32 %v1519, %v2002
        %2004 = vmatprep.mubr.bf16.mxu0 %v1473
        %2005 = vmatmul.mubr.bf16.gmra.mrb[0].mxu0 %v1472
        %v2006 = vpop.f32.mrb[0].mxu0
        %v2007 = vadd.f32 %v1515, %v2006
        %v2008 = vpop.f32.mrb[0].mxu0
        %v2009 = vadd.f32 %v1519, %v2008
        %v2010 = vpop.f32.mrb[0].mxu0
        %v2011 = vadd.f32 %v1515, %v2010
        %v2012 = vpop.f32.mrb[0].mxu0
        %v2013 = vadd.f32 %v1519, %v2012
        %2014 = vmatprep.mubr.bf16.mxu0 %v1475
        %2015 = vmatmul.mubr.bf16.gmra.mrb[0].mxu0 %v1474
        %v2016 = vpop.f32.mrb[0].mxu0
        %v2017 = vadd.f32 %v1515, %v2016
        %v2018 = vpop.f32.mrb[0].mxu0
        %v2019 = vadd.f32 %v1519, %v2018
        %v2020 = vpop.f32.mrb[0].mxu0
        %v2021 = vadd.f32 %v1515, %v2020
        %v2022 = vpop.f32.mrb[0].mxu0
        %v2023 = vadd.f32 %v1519, %v2022
        %2024 = vmatprep.mubr.bf16.mxu0 %v1477
        %2025 = vmatmul.mubr.bf16.gmra.mrb[0].mxu0 %v1476
        %v2026 = vpop.f32.mrb[0].mxu0
        %v2027 = vadd.f32 %v1515, %v2026
        %v2028 = vpop.f32.mrb[0].mxu0
        %v2029 = vadd.f32 %v1519, %v2028
        %v2030 = vpop.f32.mrb[0].mxu0
        %v2031 = vadd.f32 %v1515, %v2030
        %v2032 = vpop.f32.mrb[0].mxu0
        %v2033 = vadd.f32 %v1519, %v2032
        %2034 = vdwg.mxu0
        %v2035 = vmax.f32 %v1717, 0.0
        %v2036 = vmax.f32 %v1719, 0.0
        %v2037 = vmax.f32 %v1721, 0.0
        %v2038 = vmax.f32 %v1723, 0.0
        %v2039 = vmax.f32 %v1727, 0.0
        %v2040 = vmax.f32 %v1729, 0.0
        %v2041 = vmax.f32 %v1731, 0.0
        %v2042 = vmax.f32 %v1733, 0.0
        %v2043 = vmax.f32 %v1737, 0.0
        %v2044 = vmax.f32 %v1739, 0.0
        %v2045 = vmax.f32 %v1741, 0.0
        %v2046 = vmax.f32 %v1743, 0.0
        %v2047 = vmax.f32 %v1747, 0.0
        %v2048 = vmax.f32 %v1749, 0.0
        %v2049 = vmax.f32 %v1751, 0.0
        %v2050 = vmax.f32 %v1753, 0.0
        %v2051 = vmax.f32 %v1757, 0.0
        %v2052 = vmax.f32 %v1759, 0.0
        %v2053 = vmax.f32 %v1761, 0.0
        %v2054 = vmax.f32 %v1763, 0.0
        %v2055 = vmax.f32 %v1767, 0.0
        %v2056 = vmax.f32 %v1769, 0.0
        %v2057 = vmax.f32 %v1771, 0.0
        %v2058 = vmax.f32 %v1773, 0.0
        %v2059 = vmax.f32 %v1777, 0.0
        %v2060 = vmax.f32 %v1779, 0.0
        %v2061 = vmax.f32 %v1781, 0.0
        %v2062 = vmax.f32 %v1783, 0.0
        %v2063 = vmax.f32 %v1787, 0.0
        %v2064 = vmax.f32 %v1789, 0.0
        %v2065 = vmax.f32 %v1791, 0.0
        %v2066 = vmax.f32 %v1793, 0.0
        %v2067 = vmax.f32 %v1797, 0.0
        %v2068 = vmax.f32 %v1799, 0.0
        %v2069 = vmax.f32 %v1801, 0.0
        %v2070 = vmax.f32 %v1803, 0.0
        %v2071 = vmax.f32 %v1807, 0.0
        %v2072 = vmax.f32 %v1809, 0.0
        %v2073 = vmax.f32 %v1811, 0.0
        %v2074 = vmax.f32 %v1813, 0.0
        %v2075 = vmax.f32 %v1817, 0.0
        %v2076 = vmax.f32 %v1819, 0.0
        %v2077 = vmax.f32 %v1821, 0.0
        %v2078 = vmax.f32 %v1823, 0.0
        %v2079 = vmax.f32 %v1827, 0.0
        %v2080 = vmax.f32 %v1829, 0.0
        %v2081 = vmax.f32 %v1831, 0.0
        %v2082 = vmax.f32 %v1833, 0.0
        %v2083 = vmax.f32 %v1837, 0.0
        %v2084 = vmax.f32 %v1839, 0.0
        %v2085 = vmax.f32 %v1841, 0.0
        %v2086 = vmax.f32 %v1843, 0.0
        %v2087 = vmax.f32 %v1847, 0.0
        %v2088 = vmax.f32 %v1849, 0.0
        %v2089 = vmax.f32 %v1851, 0.0
        %v2090 = vmax.f32 %v1853, 0.0
        %v2091 = vmax.f32 %v1857, 0.0
        %v2092 = vmax.f32 %v1859, 0.0
        %v2093 = vmax.f32 %v1861, 0.0
        %v2094 = vmax.f32 %v1863, 0.0
        %v2095 = vmax.f32 %v1867, 0.0
        %v2096 = vmax.f32 %v1869, 0.0
        %v2097 = vmax.f32 %v1871, 0.0
        %v2098 = vmax.f32 %v1873, 0.0
        %v2099 = vmax.f32 %v1877, 0.0
        %v2100 = vmax.f32 %v1879, 0.0
        %v2101 = vmax.f32 %v1881, 0.0
        %v2102 = vmax.f32 %v1883, 0.0
        %v2103 = vmax.f32 %v1887, 0.0
        %v2104 = vmax.f32 %v1889, 0.0
        %v2105 = vmax.f32 %v1891, 0.0
        %v2106 = vmax.f32 %v1893, 0.0
        %v2107 = vmax.f32 %v1897, 0.0
        %v2108 = vmax.f32 %v1899, 0.0
        %v2109 = vmax.f32 %v1901, 0.0
        %v2110 = vmax.f32 %v1903, 0.0
        %v2111 = vmax.f32 %v1907, 0.0
        %v2112 = vmax.f32 %v1909, 0.0
        %v2113 = vmax.f32 %v1911, 0.0
        %v2114 = vmax.f32 %v1913, 0.0
        %v2115 = vmax.f32 %v1917, 0.0
        %v2116 = vmax.f32 %v1919, 0.0
        %v2117 = vmax.f32 %v1921, 0.0
        %v2118 = vmax.f32 %v1923, 0.0
        %v2119 = vmax.f32 %v1927, 0.0
        %v2120 = vmax.f32 %v1929, 0.0
        %v2121 = vmax.f32 %v1931, 0.0
        %v2122 = vmax.f32 %v1933, 0.0
        %v2123 = vmax.f32 %v1937, 0.0
        %v2124 = vmax.f32 %v1939, 0.0
        %v2125 = vmax.f32 %v1941, 0.0
        %v2126 = vmax.f32 %v1943, 0.0
        %v2127 = vmax.f32 %v1947, 0.0
        %v2128 = vmax.f32 %v1949, 0.0
        %v2129 = vmax.f32 %v1951, 0.0
        %v2130 = vmax.f32 %v1953, 0.0
        %v2131 = vmax.f32 %v1957, 0.0
        %v2132 = vmax.f32 %v1959, 0.0
        %v2133 = vmax.f32 %v1961, 0.0
        %v2134 = vmax.f32 %v1963, 0.0
        %v2135 = vmax.f32 %v1967, 0.0
        %v2136 = vmax.f32 %v1969, 0.0
        %v2137 = vmax.f32 %v1971, 0.0
        %v2138 = vmax.f32 %v1973, 0.0
        %v2139 = vmax.f32 %v1977, 0.0
        %v2140 = vmax.f32 %v1979, 0.0
        %v2141 = vmax.f32 %v1981, 0.0
        %v2142 = vmax.f32 %v1983, 0.0
        %v2143 = vmax.f32 %v1987, 0.0
        %v2144 = vmax.f32 %v1989, 0.0
        %v2145 = vmax.f32 %v1991, 0.0
        %v2146 = vmax.f32 %v1993, 0.0
        %v2147 = vmax.f32 %v1997, 0.0
        %v2148 = vmax.f32 %v1999, 0.0
        %v2149 = vmax.f32 %v2001, 0.0
        %v2150 = vmax.f32 %v2003, 0.0
        %v2151 = vmax.f32 %v2007, 0.0
        %v2152 = vmax.f32 %v2009, 0.0
        %v2153 = vmax.f32 %v2011, 0.0
        %v2154 = vmax.f32 %v2013, 0.0
        %v2155 = vmax.f32 %v2017, 0.0
        %v2156 = vmax.f32 %v2019, 0.0
        %v2157 = vmax.f32 %v2021, 0.0
        %v2158 = vmax.f32 %v2023, 0.0
        %v2159 = vmax.f32 %v2027, 0.0
        %v2160 = vmax.f32 %v2029, 0.0
        %v2161 = vmax.f32 %v2031, 0.0
        %v2162 = vmax.f32 %v2033, 0.0
        %v2163 = vpack.c.bf16 %v2037, %v2035
        %v2164 = vpack.c.bf16 %v2038, %v2036
        %v2165 = vpack.c.bf16 %v2041, %v2039
        %v2166 = vpack.c.bf16 %v2042, %v2040
        %v2167 = vpack.c.bf16 %v2045, %v2043
        %v2168 = vpack.c.bf16 %v2046, %v2044
        %v2169 = vpack.c.bf16 %v2049, %v2047
        %v2170 = vpack.c.bf16 %v2050, %v2048
        %v2171 = vpack.c.bf16 %v2053, %v2051
        %v2172 = vpack.c.bf16 %v2054, %v2052
        %v2173 = vpack.c.bf16 %v2057, %v2055
        %v2174 = vpack.c.bf16 %v2058, %v2056
        %v2175 = vpack.c.bf16 %v2061, %v2059
        %v2176 = vpack.c.bf16 %v2062, %v2060
        %v2177 = vpack.c.bf16 %v2065, %v2063
        %v2178 = vpack.c.bf16 %v2066, %v2064
        %v2179 = vpack.c.bf16 %v2069, %v2067
        %v2180 = vpack.c.bf16 %v2070, %v2068
        %v2181 = vpack.c.bf16 %v2073, %v2071
        %v2182 = vpack.c.bf16 %v2074, %v2072
        %v2183 = vpack.c.bf16 %v2077, %v2075
        %v2184 = vpack.c.bf16 %v2078, %v2076
        %v2185 = vpack.c.bf16 %v2081, %v2079
        %v2186 = vpack.c.bf16 %v2082, %v2080
        %v2187 = vpack.c.bf16 %v2085, %v2083
        %v2188 = vpack.c.bf16 %v2086, %v2084
        %v2189 = vpack.c.bf16 %v2089, %v2087
        %v2190 = vpack.c.bf16 %v2090, %v2088
        %v2191 = vpack.c.bf16 %v2093, %v2091
        %v2192 = vpack.c.bf16 %v2094, %v2092
        %v2193 = vpack.c.bf16 %v2097, %v2095
        %v2194 = vpack.c.bf16 %v2098, %v2096
        %v2195 = vpack.c.bf16 %v2101, %v2099
        %v2196 = vpack.c.bf16 %v2102, %v2100
        %v2197 = vpack.c.bf16 %v2105, %v2103
        %v2198 = vpack.c.bf16 %v2106, %v2104
        %v2199 = vpack.c.bf16 %v2109, %v2107
        %v2200 = vpack.c.bf16 %v2110, %v2108
        %v2201 = vpack.c.bf16 %v2113, %v2111
        %v2202 = vpack.c.bf16 %v2114, %v2112
        %v2203 = vpack.c.bf16 %v2117, %v2115
        %v2204 = vpack.c.bf16 %v2118, %v2116
        %v2205 = vpack.c.bf16 %v2121, %v2119
        %v2206 = vpack.c.bf16 %v2122, %v2120
        %v2207 = vpack.c.bf16 %v2125, %v2123
        %v2208 = vpack.c.bf16 %v2126, %v2124
        %v2209 = vpack.c.bf16 %v2129, %v2127
        %v2210 = vpack.c.bf16 %v2130, %v2128
        %v2211 = vpack.c.bf16 %v2133, %v2131
        %v2212 = vpack.c.bf16 %v2134, %v2132
        %v2213 = vpack.c.bf16 %v2137, %v2135
        %v2214 = vpack.c.bf16 %v2138, %v2136
        %v2215 = vpack.c.bf16 %v2141, %v2139
        %v2216 = vpack.c.bf16 %v2142, %v2140
        %v2217 = vpack.c.bf16 %v2145, %v2143
        %v2218 = vpack.c.bf16 %v2146, %v2144
        %v2219 = vpack.c.bf16 %v2149, %v2147
        %v2220 = vpack.c.bf16 %v2150, %v2148
        %v2221 = vpack.c.bf16 %v2153, %v2151
        %v2222 = vpack.c.bf16 %v2154, %v2152
        %v2223 = vpack.c.bf16 %v2157, %v2155
        %v2224 = vpack.c.bf16 %v2158, %v2156
        %v2225 = vpack.c.bf16 %v2161, %v2159
        %v2226 = vpack.c.bf16 %v2162, %v2160
        %v2227 = vld [vmem:[#allocation8] sm:$0xf]
        %v2228 = vld [vmem:[#allocation8 + $0x4] sm:$0xf]
        %v2229 = vld [vmem:[#allocation8 + $0x8] sm:$0xf]
        %v2230 = vld [vmem:[#allocation8 + $0xc] sm:$0xf]
        %v2231 = vld [vmem:[#allocation8 + $0x10] sm:$0xf]
        %v2232 = vld [vmem:[#allocation8 + $0x14] sm:$0xf]
        %v2233 = vld [vmem:[#allocation8 + $0x18] sm:$0xf]
        %v2234 = vld [vmem:[#allocation8 + $0x1c] sm:$0xf]
        %v2235 = vld [vmem:[#allocation8 + $0x20] sm:$0xf]
        %v2236 = vld [vmem:[#allocation8 + $0x24] sm:$0xf]
        %v2237 = vld [vmem:[#allocation8 + $0x28] sm:$0xf]
        %v2238 = vld [vmem:[#allocation8 + $0x2c] sm:$0xf]
        %v2239 = vld [vmem:[#allocation8 + $0x30] sm:$0xf]
        %v2240 = vld [vmem:[#allocation8 + $0x34] sm:$0xf]
        %v2241 = vld [vmem:[#allocation8 + $0x38] sm:$0xf]
        %v2242 = vld [vmem:[#allocation8 + $0x3c] sm:$0xf]
        %v2243 = vld [vmem:[#allocation8 + $0x40] sm:$0xf]
        %v2244 = vld [vmem:[#allocation8 + $0x44] sm:$0xf]
        %v2245 = vld [vmem:[#allocation8 + $0x48] sm:$0xf]
        %v2246 = vld [vmem:[#allocation8 + $0x4c] sm:$0xf]
        %v2247 = vld [vmem:[#allocation8 + $0x50] sm:$0xf]
        %v2248 = vld [vmem:[#allocation8 + $0x54] sm:$0xf]
        %v2249 = vld [vmem:[#allocation8 + $0x58] sm:$0xf]
        %v2250 = vld [vmem:[#allocation8 + $0x5c] sm:$0xf]
        %v2251 = vld [vmem:[#allocation8 + $0x60] sm:$0xf]
        %v2252 = vld [vmem:[#allocation8 + $0x64] sm:$0xf]
        %v2253 = vld [vmem:[#allocation8 + $0x68] sm:$0xf]
        %v2254 = vld [vmem:[#allocation8 + $0x6c] sm:$0xf]
        %v2255 = vld [vmem:[#allocation8 + $0x70] sm:$0xf]
        %v2256 = vld [vmem:[#allocation8 + $0x74] sm:$0xf]
        %v2257 = vld [vmem:[#allocation8 + $0x78] sm:$0xf]
        %v2258 = vld [vmem:[#allocation8 + $0x7c] sm:$0xf]
        %v2259 = vld [vmem:[%s6] sm:$0x1]
        %v2261 = vlaneseq
        %v2262 = vshrl.u32 %v2261, 7
        %v2263 = vsub.s32 0, %v2262
        %v2264 = vrot.slane %v2259, %v2263
        %v2298 = vunpack.c.l.b16 %v2227
        %v2299 = vunpack.c.l.b16 %v2228
        %v2300 = vunpack.c.l.b16 %v2229
        %v2301 = vunpack.c.l.b16 %v2230
        %v2302 = vunpack.c.l.b16 %v2231
        %v2303 = vunpack.c.l.b16 %v2232
        %v2304 = vunpack.c.l.b16 %v2233
        %v2305 = vunpack.c.l.b16 %v2234
        %v2306 = vunpack.c.l.b16 %v2235
        %v2307 = vunpack.c.l.b16 %v2236
        %v2308 = vunpack.c.l.b16 %v2237
        %v2309 = vunpack.c.l.b16 %v2238
        %v2310 = vunpack.c.l.b16 %v2239
        %v2311 = vunpack.c.l.b16 %v2240
        %v2312 = vunpack.c.l.b16 %v2241
        %v2313 = vunpack.c.l.b16 %v2242
        %v2314 = vunpack.c.l.b16 %v2243
        %v2315 = vunpack.c.l.b16 %v2244
        %v2316 = vunpack.c.l.b16 %v2245
        %v2317 = vunpack.c.l.b16 %v2246
        %v2318 = vunpack.c.l.b16 %v2247
        %v2319 = vunpack.c.l.b16 %v2248
        %v2320 = vunpack.c.l.b16 %v2249
        %v2321 = vunpack.c.l.b16 %v2250
        %v2322 = vunpack.c.l.b16 %v2251
        %v2323 = vunpack.c.l.b16 %v2252
        %v2324 = vunpack.c.l.b16 %v2253
        %v2325 = vunpack.c.l.b16 %v2254
        %v2326 = vunpack.c.l.b16 %v2255
        %v2327 = vunpack.c.l.b16 %v2256
        %v2328 = vunpack.c.l.b16 %v2257
        %v2329 = vunpack.c.l.b16 %v2258
        %v2330 = vpack.c.b16 %v2299, %v2298
        %v2331 = vpack.c.b16 %v2301, %v2300
        %v2332 = vpack.c.b16 %v2303, %v2302
        %v2333 = vpack.c.b16 %v2305, %v2304
        %v2334 = vpack.c.b16 %v2307, %v2306
        %v2335 = vpack.c.b16 %v2309, %v2308
        %v2336 = vpack.c.b16 %v2311, %v2310
        %v2337 = vpack.c.b16 %v2313, %v2312
        %v2338 = vpack.c.b16 %v2315, %v2314
        %v2339 = vpack.c.b16 %v2317, %v2316
        %v2340 = vpack.c.b16 %v2319, %v2318
        %v2341 = vpack.c.b16 %v2321, %v2320
        %v2342 = vpack.c.b16 %v2323, %v2322
        %v2343 = vpack.c.b16 %v2325, %v2324
        %v2344 = vpack.c.b16 %v2327, %v2326
        %v2345 = vpack.c.b16 %v2329, %v2328
        %2362 = vmatprep.subr.bf16.mxu0 0
        %2363 = vmatpush1.bf16.msra.mxu0 %v2330
        %2364 = vmatprep.subr.bf16.mxu0 0
        %2365 = vmatpush1.bf16.msra.mxu0 %v2331
        %2366 = vmatprep.subr.bf16.mxu0 0
        %2367 = vmatpush1.bf16.msra.mxu0 %v2332
        %2368 = vmatprep.subr.bf16.mxu0 0
        %2369 = vmatpush1.bf16.msra.mxu0 %v2333
        %2370 = vmatprep.subr.bf16.mxu0 0
        %2371 = vmatpush1.bf16.msra.mxu0 %v2334
        %2372 = vmatprep.subr.bf16.mxu0 0
        %2373 = vmatpush1.bf16.msra.mxu0 %v2335
        %2374 = vmatprep.subr.bf16.mxu0 0
        %2375 = vmatpush1.bf16.msra.mxu0 %v2336
        %2376 = vmatprep.subr.bf16.mxu0 0
        %2377 = vmatpush1.bf16.msra.mxu0 %v2337
        %2378 = vmatprep.subr.bf16.mxu0 0
        %2379 = vmatpush1.bf16.msra.mxu0 %v2338
        %2380 = vmatprep.subr.bf16.mxu0 0
        %2381 = vmatpush1.bf16.msra.mxu0 %v2339
        %2382 = vmatprep.subr.bf16.mxu0 0
        %2383 = vmatpush1.bf16.msra.mxu0 %v2340
        %2384 = vmatprep.subr.bf16.mxu0 0
        %2385 = vmatpush1.bf16.msra.mxu0 %v2341
        %2386 = vmatprep.subr.bf16.mxu0 0
        %2387 = vmatpush1.bf16.msra.mxu0 %v2342
        %2388 = vmatprep.subr.bf16.mxu0 0
        %2389 = vmatpush1.bf16.msra.mxu0 %v2343
        %2390 = vmatprep.subr.bf16.mxu0 0
        %2391 = vmatpush1.bf16.msra.mxu0 %v2344
        %2392 = vmatprep.subr.bf16.mxu0 0
        %2393 = vmatpush1.bf16.msra.mxu0 %v2345
        %2394 = vmatprep.mubr.bf16.mxu0 %v2164
        %2395 = vmatmul.mubr.bf16.gmra.mrb[0].mxu0 %v2163
        %v2396 = vpop.f32.mrb[0].mxu0
        %v2397 = vadd.f32 %v2264, %v2396
        %v2398 = vpop.f32.mrb[0].mxu0
        %v2399 = vpop.f32.mrb[0].mxu0
        %v2400 = vadd.f32 %v2264, %v2399
        %v2401 = vpop.f32.mrb[0].mxu0
        %2402 = vmatprep.mubr.bf16.mxu0 %v2166
        %2403 = vmatmul.mubr.bf16.gmra.mrb[0].mxu0 %v2165
        %v2404 = vpop.f32.mrb[0].mxu0
        %v2405 = vadd.f32 %v2264, %v2404
        %v2406 = vpop.f32.mrb[0].mxu0
        %v2407 = vpop.f32.mrb[0].mxu0
        %v2408 = vadd.f32 %v2264, %v2407
        %v2409 = vpop.f32.mrb[0].mxu0
        %2410 = vmatprep.mubr.bf16.mxu0 %v2168
        %2411 = vmatmul.mubr.bf16.gmra.mrb[0].mxu0 %v2167
        %v2412 = vpop.f32.mrb[0].mxu0
        %v2413 = vadd.f32 %v2264, %v2412
        %v2414 = vpop.f32.mrb[0].mxu0
        %v2415 = vpop.f32.mrb[0].mxu0
        %v2416 = vadd.f32 %v2264, %v2415
        %v2417 = vpop.f32.mrb[0].mxu0
        %2418 = vmatprep.mubr.bf16.mxu0 %v2170
        %2419 = vmatmul.mubr.bf16.gmra.mrb[0].mxu0 %v2169
        %v2420 = vpop.f32.mrb[0].mxu0
        %v2421 = vadd.f32 %v2264, %v2420
        %v2422 = vpop.f32.mrb[0].mxu0
        %v2423 = vpop.f32.mrb[0].mxu0
        %v2424 = vadd.f32 %v2264, %v2423
        %v2425 = vpop.f32.mrb[0].mxu0
        %2426 = vmatprep.mubr.bf16.mxu0 %v2172
        %2427 = vmatmul.mubr.bf16.gmra.mrb[0].mxu0 %v2171
        %v2428 = vpop.f32.mrb[0].mxu0
        %v2429 = vadd.f32 %v2264, %v2428
        %v2430 = vpop.f32.mrb[0].mxu0
        %v2431 = vpop.f32.mrb[0].mxu0
        %v2432 = vadd.f32 %v2264, %v2431
        %v2433 = vpop.f32.mrb[0].mxu0
        %2434 = vmatprep.mubr.bf16.mxu0 %v2174
        %2435 = vmatmul.mubr.bf16.gmra.mrb[0].mxu0 %v2173
        %v2436 = vpop.f32.mrb[0].mxu0
        %v2437 = vadd.f32 %v2264, %v2436
        %v2438 = vpop.f32.mrb[0].mxu0
        %v2439 = vpop.f32.mrb[0].mxu0
        %v2440 = vadd.f32 %v2264, %v2439
        %v2441 = vpop.f32.mrb[0].mxu0
        %2442 = vmatprep.mubr.bf16.mxu0 %v2176
        %2443 = vmatmul.mubr.bf16.gmra.mrb[0].mxu0 %v2175
        %v2444 = vpop.f32.mrb[0].mxu0
        %v2445 = vadd.f32 %v2264, %v2444
        %v2446 = vpop.f32.mrb[0].mxu0
        %v2447 = vpop.f32.mrb[0].mxu0
        %v2448 = vadd.f32 %v2264, %v2447
        %v2449 = vpop.f32.mrb[0].mxu0
        %2450 = vmatprep.mubr.bf16.mxu0 %v2178
        %2451 = vmatmul.mubr.bf16.gmra.mrb[0].mxu0 %v2177
        %v2452 = vpop.f32.mrb[0].mxu0
        %v2453 = vadd.f32 %v2264, %v2452
        %v2454 = vpop.f32.mrb[0].mxu0
        %v2455 = vpop.f32.mrb[0].mxu0
        %v2456 = vadd.f32 %v2264, %v2455
        %v2457 = vpop.f32.mrb[0].mxu0
        %2458 = vmatprep.mubr.bf16.mxu0 %v2180
        %2459 = vmatmul.mubr.bf16.gmra.mrb[0].mxu0 %v2179
        %v2460 = vpop.f32.mrb[0].mxu0
        %v2461 = vadd.f32 %v2264, %v2460
        %v2462 = vpop.f32.mrb[0].mxu0
        %v2463 = vpop.f32.mrb[0].mxu0
        %v2464 = vadd.f32 %v2264, %v2463
        %v2465 = vpop.f32.mrb[0].mxu0
        %2466 = vmatprep.mubr.bf16.mxu0 %v2182
        %2467 = vmatmul.mubr.bf16.gmra.mrb[0].mxu0 %v2181
        %v2468 = vpop.f32.mrb[0].mxu0
        %v2469 = vadd.f32 %v2264, %v2468
        %v2470 = vpop.f32.mrb[0].mxu0
        %v2471 = vpop.f32.mrb[0].mxu0
        %v2472 = vadd.f32 %v2264, %v2471
        %v2473 = vpop.f32.mrb[0].mxu0
        %2474 = vmatprep.mubr.bf16.mxu0 %v2184
        %2475 = vmatmul.mubr.bf16.gmra.mrb[0].mxu0 %v2183
        %v2476 = vpop.f32.mrb[0].mxu0
        %v2477 = vadd.f32 %v2264, %v2476
        %v2478 = vpop.f32.mrb[0].mxu0
        %v2479 = vpop.f32.mrb[0].mxu0
        %v2480 = vadd.f32 %v2264, %v2479
        %v2481 = vpop.f32.mrb[0].mxu0
        %2482 = vmatprep.mubr.bf16.mxu0 %v2186
        %2483 = vmatmul.mubr.bf16.gmra.mrb[0].mxu0 %v2185
        %v2484 = vpop.f32.mrb[0].mxu0
        %v2485 = vadd.f32 %v2264, %v2484
        %v2486 = vpop.f32.mrb[0].mxu0
        %v2487 = vpop.f32.mrb[0].mxu0
        %v2488 = vadd.f32 %v2264, %v2487
        %v2489 = vpop.f32.mrb[0].mxu0
        %2490 = vmatprep.mubr.bf16.mxu0 %v2188
        %2491 = vmatmul.mubr.bf16.gmra.mrb[0].mxu0 %v2187
        %v2492 = vpop.f32.mrb[0].mxu0
        %v2493 = vadd.f32 %v2264, %v2492
        %v2494 = vpop.f32.mrb[0].mxu0
        %v2495 = vpop.f32.mrb[0].mxu0
        %v2496 = vadd.f32 %v2264, %v2495
        %v2497 = vpop.f32.mrb[0].mxu0
        %2498 = vmatprep.mubr.bf16.mxu0 %v2190
        %2499 = vmatmul.mubr.bf16.gmra.mrb[0].mxu0 %v2189
        %v2500 = vpop.f32.mrb[0].mxu0
        %v2501 = vadd.f32 %v2264, %v2500
        %v2502 = vpop.f32.mrb[0].mxu0
        %v2503 = vpop.f32.mrb[0].mxu0
        %v2504 = vadd.f32 %v2264, %v2503
        %v2505 = vpop.f32.mrb[0].mxu0
        %2506 = vmatprep.mubr.bf16.mxu0 %v2192
        %2507 = vmatmul.mubr.bf16.gmra.mrb[0].mxu0 %v2191
        %v2508 = vpop.f32.mrb[0].mxu0
        %v2509 = vadd.f32 %v2264, %v2508
        %v2510 = vpop.f32.mrb[0].mxu0
        %v2511 = vpop.f32.mrb[0].mxu0
        %v2512 = vadd.f32 %v2264, %v2511
        %v2513 = vpop.f32.mrb[0].mxu0
        %2514 = vmatprep.mubr.bf16.mxu0 %v2194
        %2515 = vmatmul.mubr.bf16.gmra.mrb[0].mxu0 %v2193
        %v2516 = vpop.f32.mrb[0].mxu0
        %v2517 = vadd.f32 %v2264, %v2516
        %v2518 = vpop.f32.mrb[0].mxu0
        %v2519 = vpop.f32.mrb[0].mxu0
        %v2520 = vadd.f32 %v2264, %v2519
        %v2521 = vpop.f32.mrb[0].mxu0
        %2522 = vmatprep.mubr.bf16.mxu0 %v2196
        %2523 = vmatmul.mubr.bf16.gmra.mrb[0].mxu0 %v2195
        %v2524 = vpop.f32.mrb[0].mxu0
        %v2525 = vadd.f32 %v2264, %v2524
        %v2526 = vpop.f32.mrb[0].mxu0
        %v2527 = vpop.f32.mrb[0].mxu0
        %v2528 = vadd.f32 %v2264, %v2527
        %v2529 = vpop.f32.mrb[0].mxu0
        %2530 = vmatprep.mubr.bf16.mxu0 %v2198
        %2531 = vmatmul.mubr.bf16.gmra.mrb[0].mxu0 %v2197
        %v2532 = vpop.f32.mrb[0].mxu0
        %v2533 = vadd.f32 %v2264, %v2532
        %v2534 = vpop.f32.mrb[0].mxu0
        %v2535 = vpop.f32.mrb[0].mxu0
        %v2536 = vadd.f32 %v2264, %v2535
        %v2537 = vpop.f32.mrb[0].mxu0
        %2538 = vmatprep.mubr.bf16.mxu0 %v2200
        %2539 = vmatmul.mubr.bf16.gmra.mrb[0].mxu0 %v2199
        %v2540 = vpop.f32.mrb[0].mxu0
        %v2541 = vadd.f32 %v2264, %v2540
        %v2542 = vpop.f32.mrb[0].mxu0
        %v2543 = vpop.f32.mrb[0].mxu0
        %v2544 = vadd.f32 %v2264, %v2543
        %v2545 = vpop.f32.mrb[0].mxu0
        %2546 = vmatprep.mubr.bf16.mxu0 %v2202
        %2547 = vmatmul.mubr.bf16.gmra.mrb[0].mxu0 %v2201
        %v2548 = vpop.f32.mrb[0].mxu0
        %v2549 = vadd.f32 %v2264, %v2548
        %v2550 = vpop.f32.mrb[0].mxu0
        %v2551 = vpop.f32.mrb[0].mxu0
        %v2552 = vadd.f32 %v2264, %v2551
        %v2553 = vpop.f32.mrb[0].mxu0
        %2554 = vmatprep.mubr.bf16.mxu0 %v2204
        %2555 = vmatmul.mubr.bf16.gmra.mrb[0].mxu0 %v2203
        %v2556 = vpop.f32.mrb[0].mxu0
        %v2557 = vadd.f32 %v2264, %v2556
        %v2558 = vpop.f32.mrb[0].mxu0
        %v2559 = vpop.f32.mrb[0].mxu0
        %v2560 = vadd.f32 %v2264, %v2559
        %v2561 = vpop.f32.mrb[0].mxu0
        %2562 = vmatprep.mubr.bf16.mxu0 %v2206
        %2563 = vmatmul.mubr.bf16.gmra.mrb[0].mxu0 %v2205
        %v2564 = vpop.f32.mrb[0].mxu0
        %v2565 = vadd.f32 %v2264, %v2564
        %v2566 = vpop.f32.mrb[0].mxu0
        %v2567 = vpop.f32.mrb[0].mxu0
        %v2568 = vadd.f32 %v2264, %v2567
        %v2569 = vpop.f32.mrb[0].mxu0
        %2570 = vmatprep.mubr.bf16.mxu0 %v2208
        %2571 = vmatmul.mubr.bf16.gmra.mrb[0].mxu0 %v2207
        %v2572 = vpop.f32.mrb[0].mxu0
        %v2573 = vadd.f32 %v2264, %v2572
        %v2574 = vpop.f32.mrb[0].mxu0
        %v2575 = vpop.f32.mrb[0].mxu0
        %v2576 = vadd.f32 %v2264, %v2575
        %v2577 = vpop.f32.mrb[0].mxu0
        %2578 = vmatprep.mubr.bf16.mxu0 %v2210
        %2579 = vmatmul.mubr.bf16.gmra.mrb[0].mxu0 %v2209
        %v2580 = vpop.f32.mrb[0].mxu0
        %v2581 = vadd.f32 %v2264, %v2580
        %v2582 = vpop.f32.mrb[0].mxu0
        %v2583 = vpop.f32.mrb[0].mxu0
        %v2584 = vadd.f32 %v2264, %v2583
        %v2585 = vpop.f32.mrb[0].mxu0
        %2586 = vmatprep.mubr.bf16.mxu0 %v2212
        %2587 = vmatmul.mubr.bf16.gmra.mrb[0].mxu0 %v2211
        %v2588 = vpop.f32.mrb[0].mxu0
        %v2589 = vadd.f32 %v2264, %v2588
        %v2590 = vpop.f32.mrb[0].mxu0
        %v2591 = vpop.f32.mrb[0].mxu0
        %v2592 = vadd.f32 %v2264, %v2591
        %v2593 = vpop.f32.mrb[0].mxu0
        %2594 = vmatprep.mubr.bf16.mxu0 %v2214
        %2595 = vmatmul.mubr.bf16.gmra.mrb[0].mxu0 %v2213
        %v2596 = vpop.f32.mrb[0].mxu0
        %v2597 = vadd.f32 %v2264, %v2596
        %v2598 = vpop.f32.mrb[0].mxu0
        %v2599 = vpop.f32.mrb[0].mxu0
        %v2600 = vadd.f32 %v2264, %v2599
        %v2601 = vpop.f32.mrb[0].mxu0
        %2602 = vmatprep.mubr.bf16.mxu0 %v2216
        %2603 = vmatmul.mubr.bf16.gmra.mrb[0].mxu0 %v2215
        %v2604 = vpop.f32.mrb[0].mxu0
        %v2605 = vadd.f32 %v2264, %v2604
        %v2606 = vpop.f32.mrb[0].mxu0
        %v2607 = vpop.f32.mrb[0].mxu0
        %v2608 = vadd.f32 %v2264, %v2607
        %v2609 = vpop.f32.mrb[0].mxu0
        %2610 = vmatprep.mubr.bf16.mxu0 %v2218
        %2611 = vmatmul.mubr.bf16.gmra.mrb[0].mxu0 %v2217
        %v2612 = vpop.f32.mrb[0].mxu0
        %v2613 = vadd.f32 %v2264, %v2612
        %v2614 = vpop.f32.mrb[0].mxu0
        %v2615 = vpop.f32.mrb[0].mxu0
        %v2616 = vadd.f32 %v2264, %v2615
        %v2617 = vpop.f32.mrb[0].mxu0
        %2618 = vmatprep.mubr.bf16.mxu0 %v2220
        %2619 = vmatmul.mubr.bf16.gmra.mrb[0].mxu0 %v2219
        %v2620 = vpop.f32.mrb[0].mxu0
        %v2621 = vadd.f32 %v2264, %v2620
        %v2622 = vpop.f32.mrb[0].mxu0
        %v2623 = vpop.f32.mrb[0].mxu0
        %v2624 = vadd.f32 %v2264, %v2623
        %v2625 = vpop.f32.mrb[0].mxu0
        %2626 = vmatprep.mubr.bf16.mxu0 %v2222
        %2627 = vmatmul.mubr.bf16.gmra.mrb[0].mxu0 %v2221
        %v2628 = vpop.f32.mrb[0].mxu0
        %v2629 = vadd.f32 %v2264, %v2628
        %v2630 = vpop.f32.mrb[0].mxu0
        %v2631 = vpop.f32.mrb[0].mxu0
        %v2632 = vadd.f32 %v2264, %v2631
        %v2633 = vpop.f32.mrb[0].mxu0
        %2634 = vmatprep.mubr.bf16.mxu0 %v2224
        %2635 = vmatmul.mubr.bf16.gmra.mrb[0].mxu0 %v2223
        %v2636 = vpop.f32.mrb[0].mxu0
        %v2637 = vadd.f32 %v2264, %v2636
        %v2638 = vpop.f32.mrb[0].mxu0
        %v2639 = vpop.f32.mrb[0].mxu0
        %v2640 = vadd.f32 %v2264, %v2639
        %v2641 = vpop.f32.mrb[0].mxu0
        %2642 = vmatprep.mubr.bf16.mxu0 %v2226
        %2643 = vmatmul.mubr.bf16.gmra.mrb[0].mxu0 %v2225
        %v2644 = vpop.f32.mrb[0].mxu0
        %v2645 = vadd.f32 %v2264, %v2644
        %v2646 = vpop.f32.mrb[0].mxu0
        %v2647 = vpop.f32.mrb[0].mxu0
        %v2648 = vadd.f32 %v2264, %v2647
        %v2649 = vpop.f32.mrb[0].mxu0
        %2650 = vdwg.mxu0
        %2651 = vst [vmem:[%s341] sm:$0xff] %v2397
        %2652 = vst [vmem:[%s341 + $0x8] sm:$0xff] %v2400
        %2653 = vst [vmem:[%s341 + $0x10] sm:$0xff] %v2405
        %2654 = vst [vmem:[%s341 + $0x18] sm:$0xff] %v2408
        %2655 = vst [vmem:[%s341 + $0x20] sm:$0xff] %v2413
        %2656 = vst [vmem:[%s341 + $0x28] sm:$0xff] %v2416
        %2657 = vst [vmem:[%s341 + $0x30] sm:$0xff] %v2421
        %2658 = vst [vmem:[%s341 + $0x38] sm:$0xff] %v2424
        %2659 = vst [vmem:[%s341 + $0x40] sm:$0xff] %v2429
        %2660 = vst [vmem:[%s341 + $0x48] sm:$0xff] %v2432
        %2661 = vst [vmem:[%s341 + $0x50] sm:$0xff] %v2437
        %2662 = vst [vmem:[%s341 + $0x58] sm:$0xff] %v2440
        %2663 = vst [vmem:[%s341 + $0x60] sm:$0xff] %v2445
        %2664 = vst [vmem:[%s341 + $0x68] sm:$0xff] %v2448
        %2665 = vst [vmem:[%s341 + $0x70] sm:$0xff] %v2453
        %2666 = vst [vmem:[%s341 + $0x78] sm:$0xff] %v2456
        %2667 = vst [vmem:[%s341 + $0x80] sm:$0xff] %v2461
        %2668 = vst [vmem:[%s341 + $0x88] sm:$0xff] %v2464
        %2669 = vst [vmem:[%s341 + $0x90] sm:$0xff] %v2469
        %2670 = vst [vmem:[%s341 + $0x98] sm:$0xff] %v2472
        %2671 = vst [vmem:[%s341 + $0xa0] sm:$0xff] %v2477
        %2672 = vst [vmem:[%s341 + $0xa8] sm:$0xff] %v2480
        %2673 = vst [vmem:[%s341 + $0xb0] sm:$0xff] %v2485
        %2674 = vst [vmem:[%s341 + $0xb8] sm:$0xff] %v2488
        %2675 = vst [vmem:[%s341 + $0xc0] sm:$0xff] %v2493
        %2676 = vst [vmem:[%s341 + $0xc8] sm:$0xff] %v2496
        %2677 = vst [vmem:[%s341 + $0xd0] sm:$0xff] %v2501
        %2678 = vst [vmem:[%s341 + $0xd8] sm:$0xff] %v2504
        %2679 = vst [vmem:[%s341 + $0xe0] sm:$0xff] %v2509
        %2680 = vst [vmem:[%s341 + $0xe8] sm:$0xff] %v2512
        %2681 = vst [vmem:[%s341 + $0xf0] sm:$0xff] %v2517
        %2682 = vst [vmem:[%s341 + $0xf8] sm:$0xff] %v2520
        %2683 = vst [vmem:[%s341 + $0x100] sm:$0xff] %v2525
        %2684 = vst [vmem:[%s341 + $0x108] sm:$0xff] %v2528
        %2685 = vst [vmem:[%s341 + $0x110] sm:$0xff] %v2533
        %2686 = vst [vmem:[%s341 + $0x118] sm:$0xff] %v2536
        %2687 = vst [vmem:[%s341 + $0x120] sm:$0xff] %v2541
        %2688 = vst [vmem:[%s341 + $0x128] sm:$0xff] %v2544
        %2689 = vst [vmem:[%s341 + $0x130] sm:$0xff] %v2549
        %2690 = vst [vmem:[%s341 + $0x138] sm:$0xff] %v2552
        %2691 = vst [vmem:[%s341 + $0x140] sm:$0xff] %v2557
        %2692 = vst [vmem:[%s341 + $0x148] sm:$0xff] %v2560
        %2693 = vst [vmem:[%s341 + $0x150] sm:$0xff] %v2565
        %2694 = vst [vmem:[%s341 + $0x158] sm:$0xff] %v2568
        %2695 = vst [vmem:[%s341 + $0x160] sm:$0xff] %v2573
        %2696 = vst [vmem:[%s341 + $0x168] sm:$0xff] %v2576
        %2697 = vst [vmem:[%s341 + $0x170] sm:$0xff] %v2581
        %2698 = vst [vmem:[%s341 + $0x178] sm:$0xff] %v2584
        %2699 = vst [vmem:[%s341 + $0x180] sm:$0xff] %v2589
        %2700 = vst [vmem:[%s341 + $0x188] sm:$0xff] %v2592
        %2701 = vst [vmem:[%s341 + $0x190] sm:$0xff] %v2597
        %2702 = vst [vmem:[%s341 + $0x198] sm:$0xff] %v2600
        %2703 = vst [vmem:[%s341 + $0x1a0] sm:$0xff] %v2605
        %2704 = vst [vmem:[%s341 + $0x1a8] sm:$0xff] %v2608
        %2705 = vst [vmem:[%s341 + $0x1b0] sm:$0xff] %v2613
        %2706 = vst [vmem:[%s341 + $0x1b8] sm:$0xff] %v2616
        %2707 = vst [vmem:[%s341 + $0x1c0] sm:$0xff] %v2621
        %2708 = vst [vmem:[%s341 + $0x1c8] sm:$0xff] %v2624
        %2709 = vst [vmem:[%s341 + $0x1d0] sm:$0xff] %v2629
        %2710 = vst [vmem:[%s341 + $0x1d8] sm:$0xff] %v2632
        %2711 = vst [vmem:[%s341 + $0x1e0] sm:$0xff] %v2637
        %2712 = vst [vmem:[%s341 + $0x1e8] sm:$0xff] %v2640
        %2713 = vst [vmem:[%s341 + $0x1f0] sm:$0xff] %v2645
        %2714 = vst [vmem:[%s341 + $0x1f8] sm:$0xff] %v2648
        %s2715 = sand.u32 %s186, 1
        %s2716 = scalar_lea.sflag [#allocation4], %s2715
        %s2717 = sand.u32 %s186, 1
        %s2718 = smul.addr %s2717, 512
        %s2719 = scalar_lea.vmem [#allocation10], %s2718
        // Predicated region
        $region65: #{tpu_custom_call.1} parent=47 // pred_check
          %p2720 = pneg %p196
        $region66: #{tpu_custom_call.1} parent=47 // pred_check_branch
          %2722 = sbr.rel (%p2720) target = $region68
        $region67: #{tpu_custom_call.1} parent=47 // pred_region
          %s2723 = smul.u32 64, %s26
          %s2725 = ssub.s32 8192, 8192
          %2726 = vsyncadd %s2716, %s2725
          %s2727 = smul.addr %s2723, 128
          %s2728 = scalar_lea.hbm %s7, %s2727
          %s2729 = sshll.u32 %s2719, 4
          %s2730 = int_to_ptr.vmem [resolvable:$true] %s2729
          %2735 = dma.vmem_to_hbm [thread:$0]  %s2730, 8192, %s2728, %s2716, 128, 128, 8
        $region68: #{tpu_custom_call.1} parent=47 // pred_fallthru
          _
      $region48: #{tpu_custom_call.1} parent=5 // pred_fallthru
        _
      %p2736 = scmp.le.s32.totalorder 2, %s21
      // Predicated region
      $region69: #{tpu_custom_call.1} parent=5 // pred_check
        %p2737 = pneg %p2736
      $region70: #{tpu_custom_call.1} parent=5 // pred_check_branch
        %2739 = sbr.rel (%p2737) target = $region72
      $region71: #{tpu_custom_call.1} parent=5 // pred_region
        %s2740 = ssub.s32 %s21, 2
        // Predicated region
        $region73: #{tpu_custom_call.1} parent=71 // pred_check
          %p2741 = pneg %p202
        $region74: #{tpu_custom_call.1} parent=71 // pred_check_branch
          %2743 = sbr.rel (%p2741) target = $region76
        $region75: #{tpu_custom_call.1} parent=71 // pred_region
          %s2744 = sand.u32 %s187, 1
          %s2745 = scalar_lea.sflag [#allocation4], %s2744
          %s2746 = sand.u32 %s187, 1
          %s2747 = smul.addr %s2746, 512
          %s2748 = scalar_lea.vmem [#allocation10], %s2747
          %2749 = dma.done %s2745, 8192
        $region76: #{tpu_custom_call.1} parent=71 // pred_fallthru
          _
      $region72: #{tpu_custom_call.1} parent=5 // pred_fallthru
        _
    $region6: #{tpu_custom_call.1} parent=1 // loop_footer
      %s25 = sadd.s32 1, %s21
    $region7: #{tpu_custom_call.1} parent=1 // loop_footer_branch
      %20 = sbr.rel target = $region3
    $region8: #{tpu_custom_call.1} parent=1 // loop_exit
      _
    %2750 = vsyncpa [#allocation3], 1
    %s2751 = scalar_lea.sflag [#allocation3], 1
    %2752 = vsyncpa %s2751, 1
    %2753 = vsyncpa [#allocation6], 1
    %2754 = vsyncpa [#allocation9], 1
    %2755 = vsyncpa [#allocation4], 1
    %s2756 = scalar_lea.sflag [#allocation4], 1
    %2757 = vsyncpa %s2756, 1

</llo_original>
